<compile_context>
chip_gen: v7x
topology: tpu7x:2x2x1
jax: 0.10.0
libtpu: 0.0.40
codegen_flags: <defaults>
</compile_context>

<pallas_src>
import functools
import math

import jax
import jax.numpy as jnp
from jax.experimental import pallas as pl
from jax.experimental.pallas import tpu as pltpu

LANE = 128
_NEG = -3.0e38     # finite "-inf" for max-pool padding (safe through selects / bf16 casts)


def _round_up(x, m):
    return ((x + m - 1) // m) * m


def _channel_offsets(channels):
    """128-lane-aligned channel offset for each feature level inside the pooled vector."""
    offsets, cur = [], 0
    for c in channels:
        offsets.append(cur)
        cur += _round_up(c, LANE)
    return offsets, cur                          # (offsets, G_pad)


def _full_spec(shape):
    """BlockSpec covering the whole array at every grid step (stays resident in VMEM)."""
    return pl.BlockSpec(shape, lambda *_: (0,) * len(shape))


def _feat_index_map(nblk):
    """HW-chunk index map; levels that run out of chunks clamp to their last block
    (Pallas skips re-DMA for an unchanged block index; re-max is idempotent)."""
    last = nblk - 1
    if last == 0:
        return lambda s: (0, 0, 0)
    return lambda s: (0, 0, jnp.minimum(s, last))


def _log_sigmoid(z):
    # stable log(sigmoid(z)) = -softplus(-z); no log(0) hazard.
    return jnp.minimum(z, 0.0) - jnp.log(1.0 + jnp.exp(-jnp.abs(z)))


# ---------------------------------------------------------------------------------
# Fused kernel: streaming global max pool -> mlr_lin -> [mlr_lin2 | image_embedding]
#               -> L2 norm -> text_embedding -> standardize+sigmoid -> lambda fuse
# ---------------------------------------------------------------------------------
def _fused_kernel(levels, num_classes, lam_ref, *refs):
    """levels: static tuple of (C, HW, hw_block, n_blocks, chan_offset) per FPN level."""
    nl = len(levels)
    feat_refs = refs[:nl]
    (w1_ref, b1_ref, w23_ref, b23_ref, emb_ref, mask_ref, o_ref, acc_ref) = refs[nl:]

    s = pl.program_id(0)

    # --- phase 0: init the running-max accumulator -------------------------------
    @pl.when(s == 0)
    def _():
        acc_ref[...] = jnp.full(acc_ref.shape, _NEG, acc_ref.dtype)

    # --- streaming global max pool (every grid step, VPU only) -------------------
    for (C, HW, blk, nblk, off), fr in zip(levels, feat_refs):
        chunk = fr[...].astype(jnp.float32)                      # (N, C, blk)
        if HW % blk != 0:
            # last chunk of this level is partial: mask out-of-range lanes.
            bidx = jnp.minimum(s, nblk - 1)
            lane = jax.lax.broadcasted_iota(jnp.int32, chunk.shape, 2)
            chunk = jnp.where(bidx * blk + lane < HW, chunk, _NEG)
        cmax = jnp.max(chunk, axis=-1)                           # (N, C)
        acc_ref[:, off:off + C] = jnp.maximum(acc_ref[:, off:off + C], cmax)

    # --- tail: matmuls + standardize + sigmoid + lambda fusion (last step only) ---
    @pl.when(s == pl.num_programs(0) - 1)
    def _():
        G_pad = acc_ref.shape[1]
        col_g = jax.lax.broadcasted_iota(jnp.int32, (1, G_pad), 1)
        cvalid = None
        for (C, _, _, _, off) in levels:
            cond = (col_g >= off) & (col_g < off + C)
            cvalid = cond if cvalid is None else (cvalid | cond)
        x = jnp.where(cvalid, acc_ref[...], 0.0)                 # zero padded channels

        E_pad = w1_ref.shape[1]
        N = x.shape[0]

        # mlr_lin (bf16 MXU operands, f32 accumulation)
        g = jnp.dot(x.astype(jnp.bfloat16), w1_ref[...],
                    preferred_element_type=jnp.float32) + b1_ref[...]       # (N, E_pad)

        # mlr_lin2 & image_embedding packed as one MXU call: g @ [W2 | W3]
        ti = jnp.dot(g.astype(jnp.bfloat16), w23_ref[...],
                     preferred_element_type=jnp.float32) + b23_ref[...]     # (N, 2*E_pad)
        t = ti[:, :E_pad]            # lane-aligned split (E padded to 128)
        im = ti[:, E_pad:]

        def l2norm(v):   # F.normalize(p=2): clamp ||v|| >= 1e-12  <=>  ss >= 1e-24
            ss = jnp.sum(v * v, axis=-1, keepdims=True)
            return v * jax.lax.rsqrt(jnp.maximum(ss, 1e-24))

        # text_embedding on stacked [text_features ; img_features]; kept f32.
        st = jnp.concatenate([l2norm(t), l2norm(im)], axis=0)               # (2N, E_pad)
        scores = jnp.dot(st, emb_ref[...], preferred_element_type=jnp.float32)
        ts, isc = scores[:N], scores[N:]

        # normed_score: whole-tensor standardize over the *valid* classes only.
        Cp = scores.shape[-1]
        col_c = jax.lax.broadcasted_iota(jnp.int32, (1, Cp), 1)
        valid = (col_c < num_classes).astype(jnp.float32)
        n_valid = N * num_classes

        def standardize(v):
            mean = jnp.sum(v * valid) / n_valid
            var = jnp.sum(((v - mean) * valid) ** 2) / (n_valid - 1)        # unbiased
            return (v - mean) * jax.lax.rsqrt(jnp.maximum(var, 1e-24))

        z_t = standardize(ts)
        z_i = standardize(isc)

        # lambda fusion in log space: sig(zt)**a * sig(zi)**b == exp(a*lsig_t + b*lsig_i)
        lt = _log_sigmoid(z_t)
        li = _log_sigmoid(z_i)
        lb = lam_ref[0]
        ln = lam_ref[1]
        pred_base = jnp.exp(lb * lt + (1.0 - lb) * li)
        pred_novel = jnp.exp((1.0 - ln) * lt + ln * li)
        o_ref[...] = jnp.where(mask_ref[...] > 0.5, pred_novel, pred_base)


# ---------------------------------------------------------------------------------
# Wrapper: OvMlr.pred_mlr (non-multi-scale, no CLIP inference)
# ---------------------------------------------------------------------------------
def _choose_hw_block(N, channels, hws, dtype_bytes, budget_bytes=16 << 20):
    """Largest 128-multiple HW chunk whose double-buffered footprint fits the budget."""
    blk = 2048
    while blk > 512:
        need = 2 * sum(N * c * min(blk, hw) * dtype_bytes
                       for c, hw in zip(channels, hws))
        if need <= budget_bytes:
            return blk
        blk //= 2
    return 512


def ov_mlr_pred_mlr(feature_maps, params, lambdas, num_classes, hw_block=None):
    """feature_maps: list of (N, C_l, H_l, W_l) arrays (bf16 backbone output recommended).
    params: prepare_params(...) output (packed / 128-lane padded / bf16 MXU operands).
    lambdas: (2,) f32 [lambda_base, lambda_novel] (SMEM scalars; no recompile on change).
    """
    feats = [f.reshape(f.shape[0], f.shape[1], f.shape[2] * f.shape[3])
             for f in feature_maps]
    N = feats[0].shape[0]
    channels = [f.shape[1] for f in feats]
    hws = [f.shape[2] for f in feats]
    offsets, G_pad = _channel_offsets(channels)
    dtype_bytes = feats[0].dtype.itemsize

    assert params["w1"].shape[0] == G_pad, "params packed for a different level layout"
    E_pad = params["w1"].shape[1]
    Cp = params["emb"].shape[1]

    if hw_block is None:
        hw_block = _choose_hw_block(N, channels, hws, dtype_bytes)

    levels = []
    num_steps = 1
    for C, HW, off in zip(channels, hws, offsets):
        blk = HW if HW <= hw_block else hw_block          # full dim or 128-multiple chunk
        nblk = pl.cdiv(HW, blk)
        num_steps = max(num_steps, nblk)
        levels.append((C, HW, blk, nblk, off))
    levels = tuple(levels)

    # VMEM budget: double-buffered feature chunks + resident params / scratch / output.
    feat_vmem = 2 * sum(N * C * blk * dtype_bytes for (C, _, blk, _, _) in levels)
    param_vmem = sum(int(params[k].size) * params[k].dtype.itemsize
                     for k in ("w1", "b1", "w23", "b23", "emb", "mask"))
    misc_vmem = N * G_pad * 4 + 4 * N * Cp * 4
    vmem_limit = int(min(max(feat_vmem + param_vmem + misc_vmem + (8 << 20), 32 << 20),
                         48 << 20))

    feat_bytes = sum(int(f.size) * f.dtype.itemsize for f in feats)
    cost = pl.CostEstimate(
        flops=int(sum(int(f.size) for f in feats)                 # max-pool compares
                  + 2 * N * G_pad * E_pad + 2 * N * E_pad * 2 * E_pad
                  + 2 * 2 * N * E_pad * Cp),
        transcendentals=int(8 * N * Cp),
        bytes_accessed=int(feat_bytes + param_vmem + N * Cp * 4),
    )

    in_specs = [pl.BlockSpec(memory_space=pltpu.MemorySpace.SMEM)]           # lambdas
    in_specs += [pl.BlockSpec((N, C, blk), _feat_index_map(nblk))
                 for (C, _, blk, nblk, _) in levels]                         # HW chunks
    in_specs += [_full_spec(params[k].shape)
                 for k in ("w1", "b1", "w23", "b23", "emb", "mask")]         # resident

    # NOTE: a "parallel" leading axis (megacore on v7x) would require splitting the
    # whole-tensor standardize; HW streaming dominates, so the single "arbitrary"
    # reduction axis is kept.
    out_pad = pl.pallas_call(
        functools.partial(_fused_kernel, levels, num_classes),
        grid=(num_steps,),
        in_specs=in_specs,
        out_specs=pl.BlockSpec((N, Cp), lambda s: (0, 0)),
        out_shape=jax.ShapeDtypeStruct((N, Cp), jnp.float32),
        scratch_shapes=[pltpu.VMEM((N, G_pad), jnp.float32)],   # running-max accumulator
        compiler_params=pltpu.CompilerParams(
            dimension_semantics=("arbitrary",),
            vmem_limit_bytes=vmem_limit),
        cost_estimate=cost,
    )(lambdas, *feats, params["w1"], params["b1"], params["w23"],
      params["b23"], params["emb"], params["mask"])
    return out_pad[:, :num_classes]


# ---------------------------------------------------------------------------------
# Parameter init (torch.nn.Linear-style, fp32) and one-time packing.
# ---------------------------------------------------------------------------------
def init_params(key, global_dim, embedding_dim, num_classes, normed_embedding=True):
    ks = jax.random.split(key, 7)

    def lin(kw, kb, fan_in, fan_out):
        bound = 1.0 / math.sqrt(fan_in)
        w = jax.random.uniform(kw, (fan_in, fan_out), jnp.float32, -bound, bound)
        b = jax.random.uniform(kb, (1, fan_out), jnp.float32, -bound, bound)
        return w, b

    w1, b1 = lin(ks[0], ks[1], global_dim, embedding_dim)      # mlr_lin
    w2, b2 = lin(ks[2], ks[3], embedding_dim, embedding_dim)   # mlr_lin2
    w3, b3 = lin(ks[4], ks[5], embedding_dim, embedding_dim)   # image_embedding

    # frozen CLIP text embeddings (synthetic), L2-normalized rows
    emb = jax.random.normal(ks[6], (num_classes, embedding_dim), jnp.float32)
    if normed_embedding:
        emb = emb / jnp.maximum(
            jnp.sqrt(jnp.sum(emb * emb, -1, keepdims=True)), 1e-12)
    return {"w1": w1, "b1": b1, "w2": w2, "b2": b2, "w3": w3, "b3": b3,
            "emb": emb.T}                                      # (embedding_dim, classes)


def prepare_params(p, num_classes, novel_mask, feat_channels):
    """One-time packing: [W2|W3] concat, 128-lane padding of embedding_dim / classes /
    per-level channel offsets, bf16 cast of MXU operands, novel-mask class padding."""
    E = p["w2"].shape[0]
    E_pad = _round_up(E, LANE)
    Cp = _round_up(num_classes, LANE)
    offsets, G_pad = _channel_offsets(feat_channels)

    w1 = jnp.zeros((G_pad, E_pad), jnp.float32)
    row = 0
    for c, off in zip(feat_channels, offsets):
        w1 = w1.at[off:off + c, :E].set(p["w1"][row:row + c, :])
        row += c
    b1 = jnp.zeros((1, E_pad), jnp.float32).at[:, :E].set(p["b1"])

    w23 = jnp.zeros((E_pad, 2 * E_pad), jnp.float32)
    w23 = w23.at[:E, :E].set(p["w2"]).at[:E, E_pad:E_pad + E].set(p["w3"])
    b23 = jnp.zeros((1, 2 * E_pad), jnp.float32)
    b23 = b23.at[:, :E].set(p["b2"]).at[:, E_pad:E_pad + E].set(p["b3"])

    emb = jnp.zeros((E_pad, Cp), jnp.float32).at[:E, :num_classes].set(p["emb"])
    mask = jnp.zeros((1, Cp), jnp.float32).at[:, :num_classes].set(novel_mask)

    return {"w1": w1.astype(jnp.bfloat16), "b1": b1,
            "w23": w23.astype(jnp.bfloat16), "b23": b23,
            "emb": emb, "mask": mask}


# ---------------------------------------------------------------------------------
# Pure-JAX fp32 reference (faithful to the PyTorch module) for the correctness check.
# ---------------------------------------------------------------------------------
def reference(feature_maps, params, novel_mask, lb, ln):
    pooled = [jnp.max(f.astype(jnp.float32).reshape(f.shape[0], f.shape[1], -1), axis=-1)
              for f in feature_maps]
    x = jnp.concatenate(pooled, axis=1)
    g = x @ params["w1"] + params["b1"]
    t = g @ params["w2"] + params["b2"]
    t = t / jnp.maximum(jnp.sqrt(jnp.sum(t * t, -1, keepdims=True)), 1e-12)
    im = g @ params["w3"] + params["b3"]
    im = im / jnp.maximum(jnp.sqrt(jnp.sum(im * im, -1, keepdims=True)), 1e-12)
    ts = t @ params["emb"]
    isc = im @ params["emb"]

    def norm_sig(v):
        m = jnp.mean(v)
        s = jnp.sqrt(jnp.sum((v - m) ** 2) / (v.size - 1))   # torch unbiased std
        return jax.nn.sigmoid((v - m) / s)

    ts, isc = norm_sig(ts), norm_sig(isc)
    base = ts ** lb * isc ** (1.0 - lb)
    nov = ts ** (1.0 - ln) * isc ** ln
    return jnp.where(novel_mask > 0.5, nov, base)


if __name__ == "__main__":
    key = jax.random.PRNGKey(0)
    k_feat, k_par = jax.random.split(key)

    N = 2                                                 # batch
    # two FPN-style levels (NCHW); bf16 straight from the backbone halves HBM traffic
    feat_shapes = [(N, 32, 32, 32), (N, 32, 8, 8)]
    global_dim = sum(s[1] for s in feat_shapes)           # 64
    embedding_dim = 64
    num_classes = 80
    lambda_base, lambda_novel = 0.6, 0.7
    novel_cats = [3, 7, 15, 42]

    fkeys = jax.random.split(k_feat, len(feat_shapes))
    feature_maps = [jax.random.normal(fk, s, jnp.float32).astype(jnp.bfloat16)
                    for fk, s in zip(fkeys, feat_shapes)]

    raw_params = init_params(k_par, global_dim, embedding_dim, num_classes)
    novel_mask = jnp.zeros((1, num_classes), jnp.float32).at[
        0, jnp.array(novel_cats)].set(1.0)
    prep_params = prepare_params(raw_params, num_classes, novel_mask,
                                 [s[1] for s in feat_shapes])
    lambdas = jnp.array([lambda_base, lambda_novel], jnp.float32)

    # hw_block=256 keeps the demo tiny while still exercising the multi-step
    # pipelined pool (level 0 streams in 4 chunks, level 1 stays resident);
    # real FPN maps use the VMEM-budgeted default.
    out = ov_mlr_pred_mlr(feature_maps, prep_params, lambdas, num_classes,
                          hw_block=256)
    out = jax.block_until_ready(out)

    ref = reference(feature_maps, raw_params, novel_mask, lambda_base, lambda_novel)
    assert out.shape == (N, num_classes)
    assert bool(jnp.all(jnp.isfinite(out))), "non-finite output"
    assert jnp.allclose(out, ref, atol=2e-2, rtol=2e-2), "mismatch vs reference"

    print("KERNEL_OK")
</pallas_src>

<mosaic_0001>
module attributes {stable_mosaic.version = 11 : i64} {
  func.func @_fused_kernel(%arg0: i32, %arg1: memref<2xf32, #tpu.memory_space<smem>>, %arg2: memref<2x32x256xbf16, #tpu.memory_space<vmem>>, %arg3: memref<2x32x64xbf16, #tpu.memory_space<vmem>>, %arg4: memref<256x128xbf16, #tpu.memory_space<vmem>>, %arg5: memref<1x128xf32, #tpu.memory_space<vmem>>, %arg6: memref<128x256xbf16, #tpu.memory_space<vmem>>, %arg7: memref<1x256xf32, #tpu.memory_space<vmem>>, %arg8: memref<128x128xf32, #tpu.memory_space<vmem>>, %arg9: memref<1x128xf32, #tpu.memory_space<vmem>>, %arg10: memref<2x128xf32, #tpu.memory_space<vmem>>, %arg11: memref<2x256xf32, #tpu.memory_space<vmem>>) attributes {dimension_semantics = [#tpu.dimension_semantics<arbitrary>], iteration_bounds = array<i64: 4>, scalar_prefetch = 0 : i64, scratch_operands = 1 : i64, tpu.core_type = #tpu.core_type<tc>, window_params = [{transform_indices = @transform_0, window_bounds = array<i64: 2>}, {transform_indices = @transform_1, window_bounds = array<i64: 2, 32, 256>}, {pipeline_mode = #tpu.pipeline_mode<synchronous>, transform_indices = @transform_2, window_bounds = array<i64: 2, 32, 64>}, {pipeline_mode = #tpu.pipeline_mode<synchronous>, transform_indices = @transform_3, window_bounds = array<i64: 256, 128>}, {pipeline_mode = #tpu.pipeline_mode<synchronous>, transform_indices = @transform_4, window_bounds = array<i64: 1, 128>}, {pipeline_mode = #tpu.pipeline_mode<synchronous>, transform_indices = @transform_5, window_bounds = array<i64: 128, 256>}, {pipeline_mode = #tpu.pipeline_mode<synchronous>, transform_indices = @transform_6, window_bounds = array<i64: 1, 256>}, {pipeline_mode = #tpu.pipeline_mode<synchronous>, transform_indices = @transform_7, window_bounds = array<i64: 128, 128>}, {pipeline_mode = #tpu.pipeline_mode<synchronous>, transform_indices = @transform_8, window_bounds = array<i64: 1, 128>}, {pipeline_mode = #tpu.pipeline_mode<synchronous>, transform_indices = @transform_9, window_bounds = array<i64: 2, 128>}]} {
    %c0_i32 = arith.constant 0 : i32
    %0 = arith.cmpi eq, %arg0, %c0_i32 : i32
    %1 = arith.extui %0 : i1 to i32
    %c0_i32_0 = arith.constant 0 : i32
    %2 = arith.cmpi ne, %1, %c0_i32_0 : i32
    scf.if %2 {
      %cst_15 = arith.constant -3.000000e+38 : f32
      %18 = vector.broadcast %cst_15 : f32 to vector<2x256xf32>
      %c0_16 = arith.constant 0 : index
      %c0_17 = arith.constant 0 : index
      %19 = vector.load %arg11[%c0_16, %c0_17] : memref<2x256xf32, #tpu.memory_space<vmem>>, vector<2x256xf32>
      tpu.vector_store %arg11[%c0_16, %c0_17], %18 {strides = array<i32>} : memref<2x256xf32, #tpu.memory_space<vmem>>, vector<2x256xf32>,
    } else {
    }
    %c0 = arith.constant 0 : index
    %c0_1 = arith.constant 0 : index
    %c0_2 = arith.constant 0 : index
    %3 = vector.load %arg2[%c0, %c0_1, %c0_2] : memref<2x32x256xbf16, #tpu.memory_space<vmem>>, vector<2x32x256xbf16>
    %4 = arith.extf %3 : vector<2x32x256xbf16> to vector<2x32x256xf32>
    %cst = arith.constant dense<0xFF800000> : vector<2x32xf32>
    %5 = vector.multi_reduction <maximumf>, %4, %cst [2] : vector<2x32x256xf32> to vector<2x32xf32>
    %c0_3 = arith.constant 0 : index
    %c0_4 = arith.constant 0 : index
    %6 = vector.load %arg11[%c0_3, %c0_4] : memref<2x256xf32, #tpu.memory_space<vmem>>, vector<2x32xf32>
    %7 = arith.maximumf %6, %5 : vector<2x32xf32>
    %c0_5 = arith.constant 0 : index
    %c0_6 = arith.constant 0 : index
    %8 = vector.load %arg11[%c0_5, %c0_6] : memref<2x256xf32, #tpu.memory_space<vmem>>, vector<2x32xf32>
    tpu.vector_store %arg11[%c0_5, %c0_6], %7 {strides = array<i32>} : memref<2x256xf32, #tpu.memory_space<vmem>>, vector<2x32xf32>,
    %c0_7 = arith.constant 0 : index
    %c0_8 = arith.constant 0 : index
    %c0_9 = arith.constant 0 : index
    %9 = vector.load %arg3[%c0_7, %c0_8, %c0_9] : memref<2x32x64xbf16, #tpu.memory_space<vmem>>, vector<2x32x64xbf16>
    %10 = arith.extf %9 : vector<2x32x64xbf16> to vector<2x32x64xf32>
    %cst_10 = arith.constant dense<0xFF800000> : vector<2x32xf32>
    %11 = vector.multi_reduction <maximumf>, %10, %cst_10 [2] : vector<2x32x64xf32> to vector<2x32xf32>
    %c0_11 = arith.constant 0 : index
    %c128 = arith.constant 128 : index
    %12 = vector.load %arg11[%c0_11, %c128] : memref<2x256xf32, #tpu.memory_space<vmem>>, vector<2x32xf32>
    %13 = arith.maximumf %12, %11 : vector<2x32xf32>
    %c0_12 = arith.constant 0 : index
    %c128_13 = arith.constant 128 : index
    %14 = vector.load %arg11[%c0_12, %c128_13] : memref<2x256xf32, #tpu.memory_space<vmem>>, vector<2x32xf32>
    tpu.vector_store %arg11[%c0_12, %c128_13], %13 {strides = array<i32>} : memref<2x256xf32, #tpu.memory_space<vmem>>, vector<2x32xf32>,
    %c3_i32 = arith.constant 3 : i32
    %15 = arith.cmpi eq, %arg0, %c3_i32 : i32
    %16 = arith.extui %15 : i1 to i32
    %c0_i32_14 = arith.constant 0 : i32
    %17 = arith.cmpi ne, %16, %c0_i32_14 : i32
    scf.if %17 {
      %18 = tpu.iota {dimensions = array<i32: 1>} : vector<1x256xi32>
      %c0_i32_15 = arith.constant 0 : i32
      %19 = vector.broadcast %c0_i32_15 : i32 to vector<1x256xi32>
      %20 = arith.cmpi sge, %18, %19 : vector<1x256xi32>
      %c32_i32 = arith.constant 32 : i32
      %21 = vector.broadcast %c32_i32 : i32 to vector<1x256xi32>
      %22 = arith.cmpi slt, %18, %21 : vector<1x256xi32>
      %23 = arith.andi %20, %22 : vector<1x256xi1>
      %c128_i32 = arith.constant 128 : i32
      %24 = vector.broadcast %c128_i32 : i32 to vector<1x256xi32>
      %25 = arith.cmpi sge, %18, %24 : vector<1x256xi32>
      %c160_i32 = arith.constant 160 : i32
      %26 = vector.broadcast %c160_i32 : i32 to vector<1x256xi32>
      %27 = arith.cmpi slt, %18, %26 : vector<1x256xi32>
      %28 = arith.andi %25, %27 : vector<1x256xi1>
      %29 = arith.ori %23, %28 : vector<1x256xi1>
      %c0_16 = arith.constant 0 : index
      %c0_17 = arith.constant 0 : index
      %30 = vector.load %arg11[%c0_16, %c0_17] : memref<2x256xf32, #tpu.memory_space<vmem>>, vector<2x256xf32>
      %cst_18 = arith.constant 0.000000e+00 : f32
      %31 = vector.shape_cast %29 : vector<1x256xi1> to vector<1x256xi1>
      %32 = vector.broadcast %31 : vector<1x256xi1> to vector<2x256xi1>
      %33 = vector.broadcast %cst_18 : f32 to vector<2x256xf32>
      %34 = arith.select %32, %30, %33 : vector<2x256xi1>, vector<2x256xf32>
      %35 = arith.truncf %34 : vector<2x256xf32> to vector<2x256xbf16>
      %c0_19 = arith.constant 0 : index
      %c0_20 = arith.constant 0 : index
      %36 = vector.load %arg4[%c0_19, %c0_20] : memref<256x128xbf16, #tpu.memory_space<vmem>>, vector<256x128xbf16>
      %cst_21 = arith.constant dense<0.000000e+00> : vector<2x128xf32>
      %37 = tpu.matmul %35, %36, %cst_21 {dimension_numbers = #tpu.dot_dimension_numbers<[1], [0], [0], [1], [0, 0, 1, 1], [], []>} : vector<2x256xbf16>, vector<256x128xbf16>, vector<2x128xf32> -> vector<2x128xf32>
      %c0_22 = arith.constant 0 : index
      %c0_23 = arith.constant 0 : index
      %38 = vector.load %arg5[%c0_22, %c0_23] : memref<1x128xf32, #tpu.memory_space<vmem>>, vector<1x128xf32>
      %39 = vector.broadcast %38 : vector<1x128xf32> to vector<2x128xf32>
      %40 = arith.addf %37, %39 : vector<2x128xf32>
      %41 = arith.truncf %40 : vector<2x128xf32> to vector<2x128xbf16>
      %c0_24 = arith.constant 0 : index
      %c0_25 = arith.constant 0 : index
      %42 = vector.load %arg6[%c0_24, %c0_25] : memref<128x256xbf16, #tpu.memory_space<vmem>>, vector<128x256xbf16>
      %cst_26 = arith.constant dense<0.000000e+00> : vector<2x256xf32>
      %43 = tpu.matmul %41, %42, %cst_26 {dimension_numbers = #tpu.dot_dimension_numbers<[1], [0], [0], [1], [0, 0, 1, 1], [], []>} : vector<2x128xbf16>, vector<128x256xbf16>, vector<2x256xf32> -> vector<2x256xf32>
      %c0_27 = arith.constant 0 : index
      %c0_28 = arith.constant 0 : index
      %44 = vector.load %arg7[%c0_27, %c0_28] : memref<1x256xf32, #tpu.memory_space<vmem>>, vector<1x256xf32>
      %45 = vector.broadcast %44 : vector<1x256xf32> to vector<2x256xf32>
      %46 = arith.addf %43, %45 : vector<2x256xf32>
      %47 = vector.extract_strided_slice %46 {offsets = [0, 0], sizes = [2, 128], strides = [1, 1]} : vector<2x256xf32> to vector<2x128xf32>
      %48 = vector.extract_strided_slice %46 {offsets = [0, 128], sizes = [2, 128], strides = [1, 1]} : vector<2x256xf32> to vector<2x128xf32>
      %49 = arith.mulf %47, %47 : vector<2x128xf32>
      %cst_29 = arith.constant dense<0.000000e+00> : vector<2xf32>
      %50 = vector.multi_reduction <add>, %49, %cst_29 [1] : vector<2x128xf32> to vector<2xf32>
      %51 = vector.shape_cast %50 : vector<2xf32> to vector<2x1xf32>
      %cst_30 = arith.constant 1.000000e-24 : f32
      %52 = vector.broadcast %cst_30 : f32 to vector<2x1xf32>
      %53 = arith.maximumf %51, %52 : vector<2x1xf32>
      %54 = math.rsqrt %53 : vector<2x1xf32>
      %55 = vector.broadcast %54 : vector<2x1xf32> to vector<2x128xf32>
      %56 = arith.mulf %47, %55 : vector<2x128xf32>
      %57 = arith.mulf %48, %48 : vector<2x128xf32>
      %cst_31 = arith.constant dense<0.000000e+00> : vector<2xf32>
      %58 = vector.multi_reduction <add>, %57, %cst_31 [1] : vector<2x128xf32> to vector<2xf32>
      %59 = vector.shape_cast %58 : vector<2xf32> to vector<2x1xf32>
      %cst_32 = arith.constant 1.000000e-24 : f32
      %60 = vector.broadcast %cst_32 : f32 to vector<2x1xf32>
      %61 = arith.maximumf %59, %60 : vector<2x1xf32>
      %62 = math.rsqrt %61 : vector<2x1xf32>
      %63 = vector.broadcast %62 : vector<2x1xf32> to vector<2x128xf32>
      %64 = arith.mulf %48, %63 : vector<2x128xf32>
      %65 = tpu.concatenate %56, %64 in 0 : vector<2x128xf32>, vector<2x128xf32> -> vector<4x128xf32>
      %c0_33 = arith.constant 0 : index
      %c0_34 = arith.constant 0 : index
      %66 = vector.load %arg8[%c0_33, %c0_34] : memref<128x128xf32, #tpu.memory_space<vmem>>, vector<128x128xf32>
      %cst_35 = arith.constant dense<0.000000e+00> : vector<4x128xf32>
      %67 = tpu.matmul %65, %66, %cst_35 {dimension_numbers = #tpu.dot_dimension_numbers<[1], [0], [0], [1], [0, 0, 1, 1], [], []>} : vector<4x128xf32>, vector<128x128xf32>, vector<4x128xf32> -> vector<4x128xf32>
      %68 = vector.extract_strided_slice %67 {offsets = [0, 0], sizes = [2, 128], strides = [1, 1]} : vector<4x128xf32> to vector<2x128xf32>
      %69 = vector.extract_strided_slice %67 {offsets = [2, 0], sizes = [2, 128], strides = [1, 1]} : vector<4x128xf32> to vector<2x128xf32>
      %70 = tpu.iota {dimensions = array<i32: 1>} : vector<1x128xi32>
      %c80_i32 = arith.constant 80 : i32
      %71 = vector.broadcast %c80_i32 : i32 to vector<1x128xi32>
      %72 = arith.cmpi slt, %70, %71 : vector<1x128xi32>
      %73 = arith.extui %72 : vector<1x128xi1> to vector<1x128xi32>
      %74 = arith.sitofp %73 : vector<1x128xi32> to vector<1x128xf32>
      %75 = vector.broadcast %74 : vector<1x128xf32> to vector<2x128xf32>
      %76 = arith.mulf %68, %75 : vector<2x128xf32>
      %77 = vector.shape_cast %76 : vector<2x128xf32> to vector<1x2x128xf32>
      %cst_36 = arith.constant dense<0.000000e+00> : vector<1xf32>
      %78 = vector.multi_reduction <add>, %77, %cst_36 [1, 2] : vector<1x2x128xf32> to vector<1xf32>
      %79 = vector.shape_cast %78 : vector<1xf32> to vector<1x1x1xf32>
      %80 = vector.extract %79[0, 0, 0] : f32 from vector<1x1x1xf32>
      %cst_37 = arith.constant 1.600000e+02 : f32
      %81 = arith.divf %80, %cst_37 : f32
      %82 = vector.broadcast %81 : f32 to vector<2x128xf32>
      %83 = arith.subf %68, %82 : vector<2x128xf32>
      %84 = vector.broadcast %74 : vector<1x128xf32> to vector<2x128xf32>
      %85 = arith.mulf %83, %84 : vector<2x128xf32>
      %86 = arith.mulf %85, %85 : vector<2x128xf32>
      %87 = vector.shape_cast %86 : vector<2x128xf32> to vector<1x2x128xf32>
      %cst_38 = arith.constant dense<0.000000e+00> : vector<1xf32>
      %88 = vector.multi_reduction <add>, %87, %cst_38 [1, 2] : vector<1x2x128xf32> to vector<1xf32>
      %89 = vector.shape_cast %88 : vector<1xf32> to vector<1x1x1xf32>
      %90 = vector.extract %89[0, 0, 0] : f32 from vector<1x1x1xf32>
      %cst_39 = arith.constant 1.590000e+02 : f32
      %91 = arith.divf %90, %cst_39 : f32
      %92 = vector.broadcast %81 : f32 to vector<2x128xf32>
      %93 = arith.subf %68, %92 : vector<2x128xf32>
      %cst_40 = arith.constant 1.000000e-24 : f32
      %94 = arith.maximumf %91, %cst_40 : f32
      %95 = math.rsqrt %94 : f32
      %96 = vector.broadcast %95 : f32 to vector<2x128xf32>
      %97 = arith.mulf %93, %96 : vector<2x128xf32>
      %98 = vector.broadcast %74 : vector<1x128xf32> to vector<2x128xf32>
      %99 = arith.mulf %69, %98 : vector<2x128xf32>
      %100 = vector.shape_cast %99 : vector<2x128xf32> to vector<1x2x128xf32>
      %cst_41 = arith.constant dense<0.000000e+00> : vector<1xf32>
      %101 = vector.multi_reduction <add>, %100, %cst_41 [1, 2] : vector<1x2x128xf32> to vector<1xf32>
      %102 = vector.shape_cast %101 : vector<1xf32> to vector<1x1x1xf32>
      %103 = vector.extract %102[0, 0, 0] : f32 from vector<1x1x1xf32>
      %cst_42 = arith.constant 1.600000e+02 : f32
      %104 = arith.divf %103, %cst_42 : f32
      %105 = vector.broadcast %104 : f32 to vector<2x128xf32>
      %106 = arith.subf %69, %105 : vector<2x128xf32>
      %107 = vector.broadcast %74 : vector<1x128xf32> to vector<2x128xf32>
      %108 = arith.mulf %106, %107 : vector<2x128xf32>
      %109 = arith.mulf %108, %108 : vector<2x128xf32>
      %110 = vector.shape_cast %109 : vector<2x128xf32> to vector<1x2x128xf32>
      %cst_43 = arith.constant dense<0.000000e+00> : vector<1xf32>
      %111 = vector.multi_reduction <add>, %110, %cst_43 [1, 2] : vector<1x2x128xf32> to vector<1xf32>
      %112 = vector.shape_cast %111 : vector<1xf32> to vector<1x1x1xf32>
      %113 = vector.extract %112[0, 0, 0] : f32 from vector<1x1x1xf32>
      %cst_44 = arith.constant 1.590000e+02 : f32
      %114 = arith.divf %113, %cst_44 : f32
      %115 = vector.broadcast %104 : f32 to vector<2x128xf32>
      %116 = arith.subf %69, %115 : vector<2x128xf32>
      %cst_45 = arith.constant 1.000000e-24 : f32
      %117 = arith.maximumf %114, %cst_45 : f32
      %118 = math.rsqrt %117 : f32
      %119 = vector.broadcast %118 : f32 to vector<2x128xf32>
      %120 = arith.mulf %116, %119 : vector<2x128xf32>
      %cst_46 = arith.constant 0.000000e+00 : f32
      %121 = vector.broadcast %cst_46 : f32 to vector<2x128xf32>
      %122 = arith.minimumf %97, %121 : vector<2x128xf32>
      %123 = math.absf %97 : vector<2x128xf32>
      %cst_47 = arith.constant 0.000000e+00 : f32
      %124 = vector.broadcast %cst_47 : f32 to vector<2x128xf32>
      %125 = arith.subf %124, %123 : vector<2x128xf32>
      %126 = math.exp %125 : vector<2x128xf32>
      %cst_48 = arith.constant 1.000000e+00 : f32
      %127 = vector.broadcast %cst_48 : f32 to vector<2x128xf32>
      %128 = arith.addf %127, %126 : vector<2x128xf32>
      %129 = math.log %128 : vector<2x128xf32>
      %130 = arith.subf %122, %129 : vector<2x128xf32>
      %cst_49 = arith.constant 0.000000e+00 : f32
      %131 = vector.broadcast %cst_49 : f32 to vector<2x128xf32>
      %132 = arith.minimumf %120, %131 : vector<2x128xf32>
      %133 = math.absf %120 : vector<2x128xf32>
      %cst_50 = arith.constant 0.000000e+00 : f32
      %134 = vector.broadcast %cst_50 : f32 to vector<2x128xf32>
      %135 = arith.subf %134, %133 : vector<2x128xf32>
      %136 = math.exp %135 : vector<2x128xf32>
      %cst_51 = arith.constant 1.000000e+00 : f32
      %137 = vector.broadcast %cst_51 : f32 to vector<2x128xf32>
      %138 = arith.addf %137, %136 : vector<2x128xf32>
      %139 = math.log %138 : vector<2x128xf32>
      %140 = arith.subf %132, %139 : vector<2x128xf32>
      %c0_52 = arith.constant 0 : index
      %141 = memref.load %arg1[%c0_52] : memref<2xf32, #tpu.memory_space<smem>>
      %c1 = arith.constant 1 : index
      %142 = memref.load %arg1[%c1] : memref<2xf32, #tpu.memory_space<smem>>
      %143 = vector.broadcast %141 : f32 to vector<2x128xf32>
      %144 = arith.mulf %143, %130 : vector<2x128xf32>
      %cst_53 = arith.constant 1.000000e+00 : f32
      %145 = arith.subf %cst_53, %141 : f32
      %146 = vector.broadcast %145 : f32 to vector<2x128xf32>
      %147 = arith.mulf %146, %140 : vector<2x128xf32>
      %148 = arith.addf %144, %147 : vector<2x128xf32>
      %149 = math.exp %148 : vector<2x128xf32>
      %cst_54 = arith.constant 1.000000e+00 : f32
      %150 = arith.subf %cst_54, %142 : f32
      %151 = vector.broadcast %150 : f32 to vector<2x128xf32>
      %152 = arith.mulf %151, %130 : vector<2x128xf32>
      %153 = vector.broadcast %142 : f32 to vector<2x128xf32>
      %154 = arith.mulf %153, %140 : vector<2x128xf32>
      %155 = arith.addf %152, %154 : vector<2x128xf32>
      %156 = math.exp %155 : vector<2x128xf32>
      %c0_55 = arith.constant 0 : index
      %c0_56 = arith.constant 0 : index
      %157 = vector.load %arg9[%c0_55, %c0_56] : memref<1x128xf32, #tpu.memory_space<vmem>>, vector<1x128xf32>
      %cst_57 = arith.constant 5.000000e-01 : f32
      %158 = vector.broadcast %cst_57 : f32 to vector<1x128xf32>
      %159 = arith.cmpf ogt, %157, %158 : vector<1x128xf32>
      %160 = vector.shape_cast %159 : vector<1x128xi1> to vector<1x128xi1>
      %161 = vector.broadcast %160 : vector<1x128xi1> to vector<2x128xi1>
      %162 = arith.select %161, %156, %149 : vector<2x128xi1>, vector<2x128xf32>
      %c0_58 = arith.constant 0 : index
      %c0_59 = arith.constant 0 : index
      %163 = vector.load %arg10[%c0_58, %c0_59] : memref<2x128xf32, #tpu.memory_space<vmem>>, vector<2x128xf32>
      tpu.vector_store %arg10[%c0_58, %c0_59], %162 {strides = array<i32>} : memref<2x128xf32, #tpu.memory_space<vmem>>, vector<2x128xf32>,
    } else {
    }
    return
  }
  func.func @transform_0(%arg0: i32) -> i32 {
    %c0_i32 = arith.constant 0 : i32
    %c0_i32_0 = arith.constant 0 : i32
    return %c0_i32 : i32
  }
  func.func @transform_1(%arg0: i32) -> (i32, i32, i32) {
    %c3_i32 = arith.constant 3 : i32
    %0 = arith.minsi %arg0, %c3_i32 : i32
    %c0_i32 = arith.constant 0 : i32
    %c0_i32_0 = arith.constant 0 : i32
    %c0_i32_1 = arith.constant 0 : i32
    return %c0_i32, %c0_i32_0, %0 : i32, i32, i32
  }
  func.func @transform_2(%arg0: i32) -> (i32, i32, i32) {
    %c0_i32 = arith.constant 0 : i32
    %c0_i32_0 = arith.constant 0 : i32
    %c0_i32_1 = arith.constant 0 : i32
    %c0_i32_2 = arith.constant 0 : i32
    return %c0_i32, %c0_i32_0, %c0_i32_1 : i32, i32, i32
  }
  func.func @transform_3(%arg0: i32) -> (i32, i32) {
    %c0_i32 = arith.constant 0 : i32
    %c0_i32_0 = arith.constant 0 : i32
    %c0_i32_1 = arith.constant 0 : i32
    return %c0_i32, %c0_i32_0 : i32, i32
  }
  func.func @transform_4(%arg0: i32) -> (i32, i32) {
    %c0_i32 = arith.constant 0 : i32
    %c0_i32_0 = arith.constant 0 : i32
    %c0_i32_1 = arith.constant 0 : i32
    return %c0_i32, %c0_i32_0 : i32, i32
  }
  func.func @transform_5(%arg0: i32) -> (i32, i32) {
    %c0_i32 = arith.constant 0 : i32
    %c0_i32_0 = arith.constant 0 : i32
    %c0_i32_1 = arith.constant 0 : i32
    return %c0_i32, %c0_i32_0 : i32, i32
  }
  func.func @transform_6(%arg0: i32) -> (i32, i32) {
    %c0_i32 = arith.constant 0 : i32
    %c0_i32_0 = arith.constant 0 : i32
    %c0_i32_1 = arith.constant 0 : i32
    return %c0_i32, %c0_i32_0 : i32, i32
  }
  func.func @transform_7(%arg0: i32) -> (i32, i32) {
    %c0_i32 = arith.constant 0 : i32
    %c0_i32_0 = arith.constant 0 : i32
    %c0_i32_1 = arith.constant 0 : i32
    return %c0_i32, %c0_i32_0 : i32, i32
  }
  func.func @transform_8(%arg0: i32) -> (i32, i32) {
    %c0_i32 = arith.constant 0 : i32
    %c0_i32_0 = arith.constant 0 : i32
    %c0_i32_1 = arith.constant 0 : i32
    return %c0_i32, %c0_i32_0 : i32, i32
  }
  func.func @transform_9(%arg0: i32) -> (i32, i32) {
    %c0_i32 = arith.constant 0 : i32
    %c0_i32_0 = arith.constant 0 : i32
    %c0_i32_1 = arith.constant 0 : i32
    return %c0_i32, %c0_i32_0 : i32, i32
  }
}

</mosaic_0001>

<llo_original>
// kernel: tpu_custom_call.1
$region0: #{tpu_custom_call.1}
  #allocation0 [shape = 'u32[]', space=smem, size = 0x4, offset = 0x4, fixed_abs, tag = 'smem constant byte address 0x4 - core index']
  #allocation1 [shape = 'u32[144,128]{1,0:T(1,128)}', space=vmem, size = 0x12000, scoped, tag = 'internal scratch']
  #allocation2 [shape = 'f32[2,256]{1,0:T(2,128)}', space=vmem, size = 0x800, scoped, tag = 'scratch operand']
  %s0 = inlined_call_operand.hbm [shape: f32[2], index: 0, kind: input, shape index: {}]
  %s1 = inlined_call_operand.hbm [shape: bf16[2,32,1024], index: 1, kind: input, shape index: {}]
  %s2 = inlined_call_operand.hbm [shape: bf16[2,32,64], index: 2, kind: input, shape index: {}]
  %s3 = inlined_call_operand.hbm [shape: bf16[256,128], index: 3, kind: input, shape index: {}]
  %s4 = inlined_call_operand.vmem [shape: f32[1,128], index: 4, kind: input, shape index: {}]
  %s5 = inlined_call_operand.hbm [shape: bf16[128,256], index: 5, kind: input, shape index: {}]
  %s6 = inlined_call_operand.vmem [shape: f32[1,256], index: 6, kind: input, shape index: {}]
  %s7 = inlined_call_operand.hbm [shape: f32[128,128], index: 7, kind: input, shape index: {}]
  %s8 = inlined_call_operand.vmem [shape: f32[1,128], index: 8, kind: input, shape index: {}]
  %s9 = inlined_call_operand.hbm [shape: f32[2,128], index: 9, kind: output, shape index: {}]
  %s10 = sld [smem:[#allocation0]]
  $region101: #{tpu_custom_call.1} parent=0
    _
  %s12 = ssub.s32 1, %s10
  %s13 = scalar_select 0, %s12, %s10
  $region1: #{tpu_custom_call.1} parent=0
    #allocation3 [shape = 'u8[512]{0}', space=smem, size = 0x200, scoped, tag = 'input window, operand 0, single buffered']
    #allocation4 [shape = 's32[2]{0}', space=sflag, size = 0x8, scoped, tag = 'scoped memory for tpu_custom_call.1']
    #allocation5 [shape = 's32[2]{0}', space=sflag, size = 0x8, scoped, tag = 'scoped memory for tpu_custom_call.1']
    #allocation6 [shape = 's32[2]{0}', space=sflag, size = 0x8, scoped, tag = 'scoped memory for tpu_custom_call.1']
    #allocation7 [shape = 'u8[65536]{0}', space=vmem, size = 0x10000, scoped, tag = 'input window, operand 1']
    #allocation8 [shape = 'u8[16384]{0}', space=vmem, size = 0x4000, scoped, tag = 'input window, operand 2, single buffered']
    #allocation9 [shape = 's32[1]{0}', space=sflag, size = 0x4, scoped, tag = 'scoped memory for tpu_custom_call.1']
    #allocation10 [shape = 'u8[65536]{0}', space=vmem, size = 0x10000, scoped, tag = 'input window, operand 3, single buffered']
    #allocation11 [shape = 'u8[65536]{0}', space=vmem, size = 0x10000, scoped, tag = 'input window, operand 5, single buffered']
    #allocation12 [shape = 's32[1]{0}', space=sflag, size = 0x4, scoped, tag = 'scoped memory for tpu_custom_call.1']
    #allocation13 [shape = 'u8[65536]{0}', space=vmem, size = 0x10000, scoped, tag = 'input window, operand 7, single buffered']
    #allocation14 [shape = 'u8[1024]{0}', space=vmem, size = 0x400, scoped, tag = 'output window, operand 0, single buffered']
    %14 = vsyncpa [#allocation6], 0
    %15 = vsyncpa [#allocation4], 0
    %s16 = scalar_lea.sflag [#allocation4], 1
    %17 = vsyncpa %s16, 0
    %18 = vsyncpa [#allocation9], 0
    %19 = vsyncpa [#allocation12], 0
    %20 = vsyncpa [#allocation5], 0
    loop: start=0, step=1, limit=6
    $region2: #{tpu_custom_call.1} parent=1 // loop_pre_header
      _
    $region3: #{tpu_custom_call.1} parent=1 // loop_header
      %s22 = sphi 0, %s26
      %p23 = scmp.ge.s32.totalorder %s22, 6
      %s30 = sphi 0, %s30
      %s32 = sphi 0, %s30
      %s33 = sphi 0, %s32
      %s47 = sphi 0, %s33
      %s57 = sphi 0, %s59
      %s60 = sphi 0, %s57
      %s61 = sphi 0, %s60
      %s77 = sphi 0, %s61
      %s81 = sphi 0, %s81
      %s83 = sphi 0, %s81
      %s84 = sphi 0, %s83
      %s98 = sphi 0, %s84
      %s102 = sphi 0, %s102
      %s104 = sphi 0, %s102
      %s105 = sphi 0, %s104
      %s119 = sphi 0, %s105
      %s123 = sphi 0, %s123
      %s125 = sphi 0, %s123
      %s126 = sphi 0, %s125
      %s140 = sphi 0, %s126
      %s144 = sphi 0, %s144
      %s146 = sphi 0, %s144
      %s147 = sphi 0, %s146
      %s161 = sphi 0, %s147
      %s165 = sphi 0, %s165
      %s167 = sphi 0, %s165
      %s168 = sphi 0, %s167
      %s182 = sphi 0, %s168
      %s186 = sphi 0, %s186
      %s188 = sphi 0, %s186
      %s189 = sphi 0, %s188
      %s203 = sphi 0, %s189
      %s207 = sphi 0, %s207
      %s209 = sphi 0, %s207
      %s210 = sphi 0, %s209
      %s224 = sphi 0, %s210
      %s228 = sphi 0, %s228
      %s230 = sphi 0, %s228
      %s231 = sphi 0, %s230
      %s245 = sphi 0, %s231
    $region4: #{tpu_custom_call.1} parent=1 // loop_header_branch
      %25 = sbr.rel (%p23) target = $region8
    $region5: #{tpu_custom_call.1} parent=1 // loop_body
      %s27 = ssub.s32 %s22, 1
      %s28 = ssub.s32 %s22, 2
      %s29 = sadd.s32 %s22, 1
      %s31 = sadd.s32 %s30, 1
      %p34 = scmp.eq.s32.totalorder %s22, 3
      %p35 = scmp.ne.s32.totalorder %s30, %s32
      %p36 = scmp.eq.s32.totalorder %s22, 0
      %p37 = por %p35, %p36
      %p38 = scmp.ne.s32.totalorder %s30, %s32
      %p39 = scmp.eq.s32.totalorder %s27, 3
      %p40 = por %p38, %p39
      %p41 = scmp.ne.s32.totalorder %s32, %s33
      %p42 = scmp.eq.s32.totalorder %s27, 0
      %p43 = por %p41, %p42
      %p44 = scmp.ne.s32.totalorder %s32, %s33
      %p45 = scmp.eq.s32.totalorder %s28, 3
      %p46 = por %p44, %p45
      %p48 = scmp.ne.s32.totalorder %s33, %s47
      %p49 = scmp.eq.s32.totalorder %s28, 0
      %p50 = por %p48, %p49
      %p51 = scmp.lt.s32.totalorder %s22, 3
      %s52 = scalar_select %p51, %s22, 3
      %p53 = scmp.lt.s32.totalorder %s29, 3
      %s54 = scalar_select %p53, %s29, 3
      %s55 = ssub.s32 %s52, %s54
      %p56 = scmp.eq.s32.totalorder %s55, 0
      %s58 = sadd.s32 %s57, 1
      %s59 = scalar_select %p56, %s57, %s58
      %p62 = pneg %p56
      %p63 = scmp.eq.s32.totalorder %s22, 3
      %p64 = por %p62, %p63
      %p65 = scmp.ne.s32.totalorder %s57, %s60
      %p66 = scmp.eq.s32.totalorder %s22, 0
      %p67 = por %p65, %p66
      %p68 = scmp.ne.s32.totalorder %s57, %s60
      %p69 = scmp.eq.s32.totalorder %s27, 3
      %p70 = por %p68, %p69
      %p71 = scmp.ne.s32.totalorder %s60, %s61
      %p72 = scmp.eq.s32.totalorder %s27, 0
      %p73 = por %p71, %p72
      %p74 = scmp.ne.s32.totalorder %s60, %s61
      %p75 = scmp.eq.s32.totalorder %s28, 3
      %p76 = por %p74, %p75
      %p78 = scmp.ne.s32.totalorder %s61, %s77
      %p79 = scmp.eq.s32.totalorder %s28, 0
      %p80 = por %p78, %p79
      %s82 = sadd.s32 %s81, 1
      %p85 = scmp.eq.s32.totalorder %s22, 3
      %p86 = scmp.ne.s32.totalorder %s81, %s83
      %p87 = scmp.eq.s32.totalorder %s22, 0
      %p88 = por %p86, %p87
      %p89 = scmp.ne.s32.totalorder %s81, %s83
      %p90 = scmp.eq.s32.totalorder %s27, 3
      %p91 = por %p89, %p90
      %p92 = scmp.ne.s32.totalorder %s83, %s84
      %p93 = scmp.eq.s32.totalorder %s27, 0
      %p94 = por %p92, %p93
      %p95 = scmp.ne.s32.totalorder %s83, %s84
      %p96 = scmp.eq.s32.totalorder %s28, 3
      %p97 = por %p95, %p96
      %p99 = scmp.ne.s32.totalorder %s84, %s98
      %p100 = scmp.eq.s32.totalorder %s28, 0
      %p101 = por %p99, %p100
      %s103 = sadd.s32 %s102, 1
      %p106 = scmp.eq.s32.totalorder %s22, 3
      %p107 = scmp.ne.s32.totalorder %s102, %s104
      %p108 = scmp.eq.s32.totalorder %s22, 0
      %p109 = por %p107, %p108
      %p110 = scmp.ne.s32.totalorder %s102, %s104
      %p111 = scmp.eq.s32.totalorder %s27, 3
      %p112 = por %p110, %p111
      %p113 = scmp.ne.s32.totalorder %s104, %s105
      %p114 = scmp.eq.s32.totalorder %s27, 0
      %p115 = por %p113, %p114
      %p116 = scmp.ne.s32.totalorder %s104, %s105
      %p117 = scmp.eq.s32.totalorder %s28, 3
      %p118 = por %p116, %p117
      %p120 = scmp.ne.s32.totalorder %s105, %s119
      %p121 = scmp.eq.s32.totalorder %s28, 0
      %p122 = por %p120, %p121
      %s124 = sadd.s32 %s123, 1
      %p127 = scmp.eq.s32.totalorder %s22, 3
      %p128 = scmp.ne.s32.totalorder %s123, %s125
      %p129 = scmp.eq.s32.totalorder %s22, 0
      %p130 = por %p128, %p129
      %p131 = scmp.ne.s32.totalorder %s123, %s125
      %p132 = scmp.eq.s32.totalorder %s27, 3
      %p133 = por %p131, %p132
      %p134 = scmp.ne.s32.totalorder %s125, %s126
      %p135 = scmp.eq.s32.totalorder %s27, 0
      %p136 = por %p134, %p135
      %p137 = scmp.ne.s32.totalorder %s125, %s126
      %p138 = scmp.eq.s32.totalorder %s28, 3
      %p139 = por %p137, %p138
      %p141 = scmp.ne.s32.totalorder %s126, %s140
      %p142 = scmp.eq.s32.totalorder %s28, 0
      %p143 = por %p141, %p142
      %s145 = sadd.s32 %s144, 1
      %p148 = scmp.eq.s32.totalorder %s22, 3
      %p149 = scmp.ne.s32.totalorder %s144, %s146
      %p150 = scmp.eq.s32.totalorder %s22, 0
      %p151 = por %p149, %p150
      %p152 = scmp.ne.s32.totalorder %s144, %s146
      %p153 = scmp.eq.s32.totalorder %s27, 3
      %p154 = por %p152, %p153
      %p155 = scmp.ne.s32.totalorder %s146, %s147
      %p156 = scmp.eq.s32.totalorder %s27, 0
      %p157 = por %p155, %p156
      %p158 = scmp.ne.s32.totalorder %s146, %s147
      %p159 = scmp.eq.s32.totalorder %s28, 3
      %p160 = por %p158, %p159
      %p162 = scmp.ne.s32.totalorder %s147, %s161
      %p163 = scmp.eq.s32.totalorder %s28, 0
      %p164 = por %p162, %p163
      %s166 = sadd.s32 %s165, 1
      %p169 = scmp.eq.s32.totalorder %s22, 3
      %p170 = scmp.ne.s32.totalorder %s165, %s167
      %p171 = scmp.eq.s32.totalorder %s22, 0
      %p172 = por %p170, %p171
      %p173 = scmp.ne.s32.totalorder %s165, %s167
      %p174 = scmp.eq.s32.totalorder %s27, 3
      %p175 = por %p173, %p174
      %p176 = scmp.ne.s32.totalorder %s167, %s168
      %p177 = scmp.eq.s32.totalorder %s27, 0
      %p178 = por %p176, %p177
      %p179 = scmp.ne.s32.totalorder %s167, %s168
      %p180 = scmp.eq.s32.totalorder %s28, 3
      %p181 = por %p179, %p180
      %p183 = scmp.ne.s32.totalorder %s168, %s182
      %p184 = scmp.eq.s32.totalorder %s28, 0
      %p185 = por %p183, %p184
      %s187 = sadd.s32 %s186, 1
      %p190 = scmp.eq.s32.totalorder %s22, 3
      %p191 = scmp.ne.s32.totalorder %s186, %s188
      %p192 = scmp.eq.s32.totalorder %s22, 0
      %p193 = por %p191, %p192
      %p194 = scmp.ne.s32.totalorder %s186, %s188
      %p195 = scmp.eq.s32.totalorder %s27, 3
      %p196 = por %p194, %p195
      %p197 = scmp.ne.s32.totalorder %s188, %s189
      %p198 = scmp.eq.s32.totalorder %s27, 0
      %p199 = por %p197, %p198
      %p200 = scmp.ne.s32.totalorder %s188, %s189
      %p201 = scmp.eq.s32.totalorder %s28, 3
      %p202 = por %p200, %p201
      %p204 = scmp.ne.s32.totalorder %s189, %s203
      %p205 = scmp.eq.s32.totalorder %s28, 0
      %p206 = por %p204, %p205
      %s208 = sadd.s32 %s207, 1
      %p211 = scmp.eq.s32.totalorder %s22, 3
      %p212 = scmp.ne.s32.totalorder %s207, %s209
      %p213 = scmp.eq.s32.totalorder %s22, 0
      %p214 = por %p212, %p213
      %p215 = scmp.ne.s32.totalorder %s207, %s209
      %p216 = scmp.eq.s32.totalorder %s27, 3
      %p217 = por %p215, %p216
      %p218 = scmp.ne.s32.totalorder %s209, %s210
      %p219 = scmp.eq.s32.totalorder %s27, 0
      %p220 = por %p218, %p219
      %p221 = scmp.ne.s32.totalorder %s209, %s210
      %p222 = scmp.eq.s32.totalorder %s28, 3
      %p223 = por %p221, %p222
      %p225 = scmp.ne.s32.totalorder %s210, %s224
      %p226 = scmp.eq.s32.totalorder %s28, 0
      %p227 = por %p225, %p226
      %s229 = sadd.s32 %s228, 1
      %p232 = scmp.eq.s32.totalorder %s22, 3
      %p233 = scmp.ne.s32.totalorder %s228, %s230
      %p234 = scmp.eq.s32.totalorder %s22, 0
      %p235 = por %p233, %p234
      %p236 = scmp.ne.s32.totalorder %s228, %s230
      %p237 = scmp.eq.s32.totalorder %s27, 3
      %p238 = por %p236, %p237
      %p239 = scmp.ne.s32.totalorder %s230, %s231
      %p240 = scmp.eq.s32.totalorder %s27, 0
      %p241 = por %p239, %p240
      %p242 = scmp.ne.s32.totalorder %s230, %s231
      %p243 = scmp.eq.s32.totalorder %s28, 3
      %p244 = por %p242, %p243
      %p246 = scmp.ne.s32.totalorder %s231, %s245
      %p247 = scmp.eq.s32.totalorder %s28, 0
      %p248 = por %p246, %p247
      %p249 = scmp.le.s32.totalorder 1, %s22
      %p250 = scmp.lt.s32.totalorder %s22, 5
      %p251 = pnand %p249, %p250
      %p252 = pneg %p251
      // Predicated region
      $region9: #{tpu_custom_call.1} parent=5 // pred_check
        _
      $region10: #{tpu_custom_call.1} parent=5 // pred_check_branch
        %254 = sbr.rel (%p251) target = $region12
      $region11: #{tpu_custom_call.1} parent=5 // pred_region
        %s255 = ssub.s32 %s22, 1
        // Predicated region
        $region13: #{tpu_custom_call.1} parent=11 // pred_check
          %p256 = pneg %p43
        $region14: #{tpu_custom_call.1} parent=11 // pred_check_branch
          %258 = sbr.rel (%p256) target = $region16
        $region15: #{tpu_custom_call.1} parent=11 // pred_region
          %s260 = ssub.s32 16, 16
          %261 = vsyncadd [#allocation6], %s260
          %264 = dma.hbm_to_smem %s0, 16, [#allocation3], [#allocation6]
        $region16: #{tpu_custom_call.1} parent=11 // pred_fallthru
          _
        // Predicated region
        $region17: #{tpu_custom_call.1} parent=11 // pred_check
          %p265 = pneg %p94
        $region18: #{tpu_custom_call.1} parent=11 // pred_check_branch
          %267 = sbr.rel (%p265) target = $region20
        $region19: #{tpu_custom_call.1} parent=11 // pred_region
          %s269 = ssub.s32 512, 512
          %270 = vsyncadd [#allocation9], %s269
          %s271 = sshll.u32 [#allocation8], 4
          %s272 = int_to_ptr.vmem [resolvable:$true] %s271
          %277 = dma.hbm_to_vmem [thread:$0]  %s2, 512, %s272, [#allocation9], 64, 64, 4
        $region20: #{tpu_custom_call.1} parent=11 // pred_fallthru
          _
        // Predicated region
        $region21: #{tpu_custom_call.1} parent=11 // pred_check
          %p278 = pneg %p115
        $region22: #{tpu_custom_call.1} parent=11 // pred_check_branch
          %280 = sbr.rel (%p278) target = $region24
        $region23: #{tpu_custom_call.1} parent=11 // pred_region
          %s282 = ssub.s32 2048, 2048
          %283 = vsyncadd [#allocation9], %s282
          %s284 = sshll.u32 [#allocation10], 4
          %s285 = int_to_ptr.vmem [resolvable:$true] %s284
          %290 = dma.hbm_to_vmem [thread:$0]  %s3, 2048, %s285, [#allocation9], 64, 64, 4
        $region24: #{tpu_custom_call.1} parent=11 // pred_fallthru
          _
        // Predicated region
        $region25: #{tpu_custom_call.1} parent=11 // pred_check
          %p291 = pneg %p136
        $region26: #{tpu_custom_call.1} parent=11 // pred_check_branch
          %293 = sbr.rel (%p291) target = $region28
        $region27: #{tpu_custom_call.1} parent=11 // pred_region
          _
        $region28: #{tpu_custom_call.1} parent=11 // pred_fallthru
          _
        // Predicated region
        $region29: #{tpu_custom_call.1} parent=11 // pred_check
          %p294 = pneg %p157
        $region30: #{tpu_custom_call.1} parent=11 // pred_check_branch
          %296 = sbr.rel (%p294) target = $region32
        $region31: #{tpu_custom_call.1} parent=11 // pred_region
          %s298 = ssub.s32 2048, 2048
          %299 = vsyncadd [#allocation12], %s298
          %s300 = sshll.u32 [#allocation11], 4
          %s301 = int_to_ptr.vmem [resolvable:$true] %s300
          %306 = dma.hbm_to_vmem [thread:$0]  %s5, 2048, %s301, [#allocation12], 128, 128, 8
        $region32: #{tpu_custom_call.1} parent=11 // pred_fallthru
          _
        // Predicated region
        $region33: #{tpu_custom_call.1} parent=11 // pred_check
          %p307 = pneg %p178
        $region34: #{tpu_custom_call.1} parent=11 // pred_check_branch
          %309 = sbr.rel (%p307) target = $region36
        $region35: #{tpu_custom_call.1} parent=11 // pred_region
          _
        $region36: #{tpu_custom_call.1} parent=11 // pred_fallthru
          _
        // Predicated region
        $region37: #{tpu_custom_call.1} parent=11 // pred_check
          %p310 = pneg %p199
        $region38: #{tpu_custom_call.1} parent=11 // pred_check_branch
          %312 = sbr.rel (%p310) target = $region40
        $region39: #{tpu_custom_call.1} parent=11 // pred_region
          %s314 = ssub.s32 2048, 2048
          %315 = vsyncadd [#allocation12], %s314
          %s316 = sshll.u32 [#allocation13], 4
          %s317 = int_to_ptr.vmem [resolvable:$true] %s316
          %322 = dma.hbm_to_vmem [thread:$0]  %s7, 2048, %s317, [#allocation12], 128, 128, 8
        $region40: #{tpu_custom_call.1} parent=11 // pred_fallthru
          _
        // Predicated region
        $region41: #{tpu_custom_call.1} parent=11 // pred_check
          %p323 = pneg %p220
        $region42: #{tpu_custom_call.1} parent=11 // pred_check_branch
          %325 = sbr.rel (%p323) target = $region44
        $region43: #{tpu_custom_call.1} parent=11 // pred_region
          _
        $region44: #{tpu_custom_call.1} parent=11 // pred_fallthru
          _
      $region12: #{tpu_custom_call.1} parent=5 // pred_fallthru
        _
      %p326 = scmp.lt.s32.totalorder %s22, 4
      // Predicated region
      $region45: #{tpu_custom_call.1} parent=5 // pred_check
        %p327 = pneg %p326
      $region46: #{tpu_custom_call.1} parent=5 // pred_check_branch
        %329 = sbr.rel (%p327) target = $region48
      $region47: #{tpu_custom_call.1} parent=5 // pred_region
        // Predicated region
        $region49: #{tpu_custom_call.1} parent=47 // pred_check
          %p330 = pneg %p67
        $region50: #{tpu_custom_call.1} parent=47 // pred_check_branch
          %332 = sbr.rel (%p330) target = $region52
        $region51: #{tpu_custom_call.1} parent=47 // pred_region
          %s333 = sand.u32 %s57, 1
          %s334 = scalar_lea.sflag [#allocation4], %s333
          %s335 = sand.u32 %s57, 1
          %s336 = smul.addr %s335, 64
          %s337 = scalar_lea.vmem [#allocation7], %s336
          %p338 = scmp.lt.s32.totalorder %s22, 3
          %s339 = scalar_select %p338, %s22, 3
          %s340 = smul.u32 2, %s339
          %s342 = ssub.s32 1024, 1024
          %343 = vsyncadd %s334, %s342
          %s344 = smul.addr %s340, 64
          %s345 = scalar_lea.hbm %s1, %s344
          %s346 = sshll.u32 %s337, 4
          %s347 = int_to_ptr.vmem [resolvable:$true] %s346
          %352 = dma.hbm_to_vmem [thread:$0]  %s345, 1024, %s347, %s334, 512, 128, 8
        $region52: #{tpu_custom_call.1} parent=47 // pred_fallthru
          _
      $region48: #{tpu_custom_call.1} parent=5 // pred_fallthru
        _
      %p353 = scmp.le.s32.totalorder 1, %s22
      %p354 = scmp.lt.s32.totalorder %s22, 5
      %p355 = pnand %p353, %p354
      %p356 = pneg %p355
      // Predicated region
      $region53: #{tpu_custom_call.1} parent=5 // pred_check
        _
      $region54: #{tpu_custom_call.1} parent=5 // pred_check_branch
        %358 = sbr.rel (%p355) target = $region56
      $region55: #{tpu_custom_call.1} parent=5 // pred_region
        %s359 = ssub.s32 %s22, 1
        // Predicated region
        $region57: #{tpu_custom_call.1} parent=55 // pred_check
          %p360 = pneg %p43
        $region58: #{tpu_custom_call.1} parent=55 // pred_check_branch
          %362 = sbr.rel (%p360) target = $region60
        $region59: #{tpu_custom_call.1} parent=55 // pred_region
          %363 = dma.done [#allocation6], 16
        $region60: #{tpu_custom_call.1} parent=55 // pred_fallthru
          _
        %s364 = sand.u32 %s60, 1
        %s365 = scalar_lea.sflag [#allocation4], %s364
        %s366 = sand.u32 %s60, 1
        %s367 = smul.addr %s366, 64
        %s368 = scalar_lea.vmem [#allocation7], %s367
        // Predicated region
        $region61: #{tpu_custom_call.1} parent=55 // pred_check
          %p369 = pneg %p73
        $region62: #{tpu_custom_call.1} parent=55 // pred_check_branch
          %371 = sbr.rel (%p369) target = $region64
        $region63: #{tpu_custom_call.1} parent=55 // pred_region
          %372 = dma.done %s365, 1024
        $region64: #{tpu_custom_call.1} parent=55 // pred_fallthru
          _
        // Predicated region
        $region65: #{tpu_custom_call.1} parent=55 // pred_check
          %p373 = pneg %p94
        $region66: #{tpu_custom_call.1} parent=55 // pred_check_branch
          %375 = sbr.rel (%p373) target = $region68
        $region67: #{tpu_custom_call.1} parent=55 // pred_region
          %376 = dma.done [#allocation9], 512
        $region68: #{tpu_custom_call.1} parent=55 // pred_fallthru
          _
        // Predicated region
        $region69: #{tpu_custom_call.1} parent=55 // pred_check
          %p377 = pneg %p115
        $region70: #{tpu_custom_call.1} parent=55 // pred_check_branch
          %379 = sbr.rel (%p377) target = $region72
        $region71: #{tpu_custom_call.1} parent=55 // pred_region
          %380 = dma.done [#allocation9], 2048
        $region72: #{tpu_custom_call.1} parent=55 // pred_fallthru
          _
        // Predicated region
        $region73: #{tpu_custom_call.1} parent=55 // pred_check
          %p381 = pneg %p157
        $region74: #{tpu_custom_call.1} parent=55 // pred_check_branch
          %383 = sbr.rel (%p381) target = $region76
        $region75: #{tpu_custom_call.1} parent=55 // pred_region
          %384 = dma.done [#allocation12], 2048
        $region76: #{tpu_custom_call.1} parent=55 // pred_fallthru
          _
        // Predicated region
        $region77: #{tpu_custom_call.1} parent=55 // pred_check
          %p385 = pneg %p199
        $region78: #{tpu_custom_call.1} parent=55 // pred_check_branch
          %387 = sbr.rel (%p385) target = $region80
        $region79: #{tpu_custom_call.1} parent=55 // pred_region
          %388 = dma.done [#allocation12], 2048
        $region80: #{tpu_custom_call.1} parent=55 // pred_fallthru
          _
        %389 = sfence
        %p390 = pneg %p43
        %p391 = pneg %p40
        %s392 = sand.u32 %s60, 1
        %s393 = scalar_lea.sflag [#allocation4], %s392
        %s394 = sand.u32 %s60, 1
        %s395 = smul.addr %s394, 64
        %s396 = scalar_lea.vmem [#allocation7], %s395
        %p397 = pneg %p73
        %p398 = pneg %p70
        %p399 = pneg %p94
        %p400 = pneg %p91
        %p401 = pneg %p115
        %p402 = pneg %p112
        %p403 = pneg %p136
        %p404 = pneg %p133
        %p405 = pneg %p157
        %p406 = pneg %p154
        %p407 = pneg %p178
        %p408 = pneg %p175
        %p409 = pneg %p199
        %p410 = pneg %p196
        %p411 = pneg %p220
        %p412 = pneg %p217
        %p413 = pneg %p241
        %p414 = pneg %p238
        %p415 = scmp.lt.s32.totalorder %s27, 3
        %s416 = scalar_select %p415, %s27, 3
        %s417 = smul.u32 2, %s416
        %p419 = scmp.eq.s32.totalorder %s27, 0
        // Predicated region
        $region81: #{tpu_custom_call.1} parent=55 // pred_check
          %p420 = pneg %p419
        $region82: #{tpu_custom_call.1} parent=55 // pred_check_branch
          %422 = sbr.rel (%p420) target = $region84
        $region83: #{tpu_custom_call.1} parent=55 // pred_region
          %423 = vst [vmem:[#allocation2] sm:$0xf] -3e+38
        $region84: #{tpu_custom_call.1} parent=55 // pred_fallthru
          _
        %v424 = vld [vmem:[%s368] sm:$0xff]
        %v425 = vld [vmem:[%s368 + $0x8] sm:$0xff]
        %v426 = vld [vmem:[%s368 + $0x10] sm:$0xff]
        %v427 = vld [vmem:[%s368 + $0x18] sm:$0xff]
        %v428 = vld [vmem:[%s368 + $0x20] sm:$0xff]
        %v429 = vld [vmem:[%s368 + $0x28] sm:$0xff]
        %v430 = vld [vmem:[%s368 + $0x30] sm:$0xff]
        %v431 = vld [vmem:[%s368 + $0x38] sm:$0xff]
        %v432 = vunpack.c.l.bf16 %v424
        %v433 = vunpack.c.h.bf16 %v424
        %v434 = vunpack.c.l.bf16 %v425
        %v435 = vunpack.c.h.bf16 %v425
        %v436 = vunpack.c.l.bf16 %v426
        %v437 = vunpack.c.h.bf16 %v426
        %v438 = vunpack.c.l.bf16 %v427
        %v439 = vunpack.c.h.bf16 %v427
        %v440 = vunpack.c.l.bf16 %v428
        %v441 = vunpack.c.h.bf16 %v428
        %v442 = vunpack.c.l.bf16 %v429
        %v443 = vunpack.c.h.bf16 %v429
        %v444 = vunpack.c.l.bf16 %v430
        %v445 = vunpack.c.h.bf16 %v430
        %v446 = vunpack.c.l.bf16 %v431
        %v447 = vunpack.c.h.bf16 %v431
        %v448 = vmax.f32 %v432, %v433
        %449 = vmax.xlane.f32.xlu0 %v448
        %v450 = vpop.xlane.xlu0 %449
        %v451 = vmax.f32 %v434, %v435
        %452 = vmax.xlane.f32.xlu0 %v451
        %v453 = vpop.xlane.xlu0 %452
        %v454 = vmax.f32 %v436, %v437
        %455 = vmax.xlane.f32.xlu0 %v454
        %v456 = vpop.xlane.xlu0 %455
        %v457 = vmax.f32 %v438, %v439
        %458 = vmax.xlane.f32.xlu0 %v457
        %v459 = vpop.xlane.xlu0 %458
        %v460 = vmax.f32 %v440, %v441
        %461 = vmax.xlane.f32.xlu0 %v460
        %v462 = vpop.xlane.xlu0 %461
        %v463 = vmax.f32 %v442, %v443
        %464 = vmax.xlane.f32.xlu0 %v463
        %v465 = vpop.xlane.xlu0 %464
        %v466 = vmax.f32 %v444, %v445
        %467 = vmax.xlane.f32.xlu0 %v466
        %v468 = vpop.xlane.xlu0 %467
        %v469 = vmax.f32 %v446, %v447
        %470 = vmax.xlane.f32.xlu0 %v469
        %v471 = vpop.xlane.xlu0 %470
        %v472 = vld [vmem:[#allocation2] sm:$0x3]
        %v482 = vunpack.c.l.s4 269488144
        %v483 = vunpack.c.0.s8 %v482
        %v484 = vlaneseq
        %v485 = vshrl.u32 %v484, 7
        %v486 = vsub.s32 %v483, %v485
        %v487 = vrot.slane %v450, %v486
        %v489 = vunpack.c.l.s4 842150450
        %v490 = vunpack.c.0.s8 %v489
        %v491 = vlaneseq
        %v492 = vshrl.u32 %v491, 7
        %v493 = vsub.s32 %v490, %v492
        %v494 = vrot.slane %v450, %v493
        %v496 = vunpack.c.l.s4 1414812756
        %v497 = vunpack.c.0.s8 %v496
        %v498 = vlaneseq
        %v499 = vshrl.u32 %v498, 7
        %v500 = vsub.s32 %v497, %v499
        %v501 = vrot.slane %v450, %v500
        %v503 = vunpack.c.l.s4 1987475062
        %v504 = vunpack.c.0.s8 %v503
        %v505 = vlaneseq
        %v506 = vshrl.u32 %v505, 7
        %v507 = vsub.s32 %v504, %v506
        %v508 = vrot.slane %v450, %v507
        %v510 = vunpack.c.l.s4 269488144
        %v511 = vunpack.c.0.s8 %v510
        %v512 = vlaneseq
        %v513 = vshrl.u32 %v512, 7
        %v514 = vsub.s32 %v511, %v513
        %v515 = vrot.slane %v453, %v514
        %v517 = vunpack.c.l.s4 842150450
        %v518 = vunpack.c.0.s8 %v517
        %v519 = vlaneseq
        %v520 = vshrl.u32 %v519, 7
        %v521 = vsub.s32 %v518, %v520
        %v522 = vrot.slane %v453, %v521
        %v524 = vunpack.c.l.s4 1414812756
        %v525 = vunpack.c.0.s8 %v524
        %v526 = vlaneseq
        %v527 = vshrl.u32 %v526, 7
        %v528 = vsub.s32 %v525, %v527
        %v529 = vrot.slane %v453, %v528
        %v531 = vunpack.c.l.s4 1987475062
        %v532 = vunpack.c.0.s8 %v531
        %v533 = vlaneseq
        %v534 = vshrl.u32 %v533, 7
        %v535 = vsub.s32 %v532, %v534
        %v536 = vrot.slane %v453, %v535
        %v538 = vunpack.c.l.s4 269488144
        %v539 = vunpack.c.0.s8 %v538
        %v540 = vlaneseq
        %v541 = vshrl.u32 %v540, 7
        %v542 = vsub.s32 %v539, %v541
        %v543 = vrot.slane %v456, %v542
        %v545 = vunpack.c.l.s4 842150450
        %v546 = vunpack.c.0.s8 %v545
        %v547 = vlaneseq
        %v548 = vshrl.u32 %v547, 7
        %v549 = vsub.s32 %v546, %v548
        %v550 = vrot.slane %v456, %v549
        %v552 = vunpack.c.l.s4 1414812756
        %v553 = vunpack.c.0.s8 %v552
        %v554 = vlaneseq
        %v555 = vshrl.u32 %v554, 7
        %v556 = vsub.s32 %v553, %v555
        %v557 = vrot.slane %v456, %v556
        %v559 = vunpack.c.l.s4 1987475062
        %v560 = vunpack.c.0.s8 %v559
        %v561 = vlaneseq
        %v562 = vshrl.u32 %v561, 7
        %v563 = vsub.s32 %v560, %v562
        %v564 = vrot.slane %v456, %v563
        %v566 = vunpack.c.l.s4 269488144
        %v567 = vunpack.c.0.s8 %v566
        %v568 = vlaneseq
        %v569 = vshrl.u32 %v568, 7
        %v570 = vsub.s32 %v567, %v569
        %v571 = vrot.slane %v459, %v570
        %v573 = vunpack.c.l.s4 842150450
        %v574 = vunpack.c.0.s8 %v573
        %v575 = vlaneseq
        %v576 = vshrl.u32 %v575, 7
        %v577 = vsub.s32 %v574, %v576
        %v578 = vrot.slane %v459, %v577
        %v580 = vunpack.c.l.s4 1414812756
        %v581 = vunpack.c.0.s8 %v580
        %v582 = vlaneseq
        %v583 = vshrl.u32 %v582, 7
        %v584 = vsub.s32 %v581, %v583
        %v585 = vrot.slane %v459, %v584
        %v587 = vunpack.c.l.s4 1987475062
        %v588 = vunpack.c.0.s8 %v587
        %v589 = vlaneseq
        %v590 = vshrl.u32 %v589, 7
        %v591 = vsub.s32 %v588, %v590
        %v592 = vrot.slane %v459, %v591
        %v594 = vunpack.c.l.s4 269488144
        %v595 = vunpack.c.0.s8 %v594
        %v596 = vlaneseq
        %v597 = vshrl.u32 %v596, 7
        %v598 = vsub.s32 %v595, %v597
        %v599 = vrot.slane %v462, %v598
        %v601 = vunpack.c.l.s4 842150450
        %v602 = vunpack.c.0.s8 %v601
        %v603 = vlaneseq
        %v604 = vshrl.u32 %v603, 7
        %v605 = vsub.s32 %v602, %v604
        %v606 = vrot.slane %v462, %v605
        %v608 = vunpack.c.l.s4 1414812756
        %v609 = vunpack.c.0.s8 %v608
        %v610 = vlaneseq
        %v611 = vshrl.u32 %v610, 7
        %v612 = vsub.s32 %v609, %v611
        %v613 = vrot.slane %v462, %v612
        %v615 = vunpack.c.l.s4 1987475062
        %v616 = vunpack.c.0.s8 %v615
        %v617 = vlaneseq
        %v618 = vshrl.u32 %v617, 7
        %v619 = vsub.s32 %v616, %v618
        %v620 = vrot.slane %v462, %v619
        %v622 = vunpack.c.l.s4 269488144
        %v623 = vunpack.c.0.s8 %v622
        %v624 = vlaneseq
        %v625 = vshrl.u32 %v624, 7
        %v626 = vsub.s32 %v623, %v625
        %v627 = vrot.slane %v465, %v626
        %v629 = vunpack.c.l.s4 842150450
        %v630 = vunpack.c.0.s8 %v629
        %v631 = vlaneseq
        %v632 = vshrl.u32 %v631, 7
        %v633 = vsub.s32 %v630, %v632
        %v634 = vrot.slane %v465, %v633
        %v636 = vunpack.c.l.s4 1414812756
        %v637 = vunpack.c.0.s8 %v636
        %v638 = vlaneseq
        %v639 = vshrl.u32 %v638, 7
        %v640 = vsub.s32 %v637, %v639
        %v641 = vrot.slane %v465, %v640
        %v643 = vunpack.c.l.s4 1987475062
        %v644 = vunpack.c.0.s8 %v643
        %v645 = vlaneseq
        %v646 = vshrl.u32 %v645, 7
        %v647 = vsub.s32 %v644, %v646
        %v648 = vrot.slane %v465, %v647
        %v650 = vunpack.c.l.s4 269488144
        %v651 = vunpack.c.0.s8 %v650
        %v652 = vlaneseq
        %v653 = vshrl.u32 %v652, 7
        %v654 = vsub.s32 %v651, %v653
        %v655 = vrot.slane %v468, %v654
        %v657 = vunpack.c.l.s4 842150450
        %v658 = vunpack.c.0.s8 %v657
        %v659 = vlaneseq
        %v660 = vshrl.u32 %v659, 7
        %v661 = vsub.s32 %v658, %v660
        %v662 = vrot.slane %v468, %v661
        %v664 = vunpack.c.l.s4 1414812756
        %v665 = vunpack.c.0.s8 %v664
        %v666 = vlaneseq
        %v667 = vshrl.u32 %v666, 7
        %v668 = vsub.s32 %v665, %v667
        %v669 = vrot.slane %v468, %v668
        %v671 = vunpack.c.l.s4 1987475062
        %v672 = vunpack.c.0.s8 %v671
        %v673 = vlaneseq
        %v674 = vshrl.u32 %v673, 7
        %v675 = vsub.s32 %v672, %v674
        %v676 = vrot.slane %v468, %v675
        %v678 = vunpack.c.l.s4 269488144
        %v679 = vunpack.c.0.s8 %v678
        %v680 = vlaneseq
        %v681 = vshrl.u32 %v680, 7
        %v682 = vsub.s32 %v679, %v681
        %v683 = vrot.slane %v471, %v682
        %v685 = vunpack.c.l.s4 842150450
        %v686 = vunpack.c.0.s8 %v685
        %v687 = vlaneseq
        %v688 = vshrl.u32 %v687, 7
        %v689 = vsub.s32 %v686, %v688
        %v690 = vrot.slane %v471, %v689
        %v692 = vunpack.c.l.s4 1414812756
        %v693 = vunpack.c.0.s8 %v692
        %v694 = vlaneseq
        %v695 = vshrl.u32 %v694, 7
        %v696 = vsub.s32 %v693, %v695
        %v697 = vrot.slane %v471, %v696
        %v699 = vunpack.c.l.s4 1987475062
        %v700 = vunpack.c.0.s8 %v699
        %v701 = vlaneseq
        %v702 = vshrl.u32 %v701, 7
        %v703 = vsub.s32 %v700, %v702
        %v704 = vrot.slane %v471, %v703
        %v705 = vcombine.low %v487, %v494
        %v706 = vcombine.low %v501, %v508
        %v708 = vunpack.c.l.s4 1983009808
        %v709 = vunpack.c.0.s8 %v708
        %v710 = vlaneseq
        %v711 = vshrl.u32 %v710, 7
        %v712 = vsub.s32 %v709, %v711
        %v713 = vrot.slane %v705, %v712
        %v715 = vunpack.c.l.s4 1983009808
        %v716 = vunpack.c.0.s8 %v715
        %v717 = vlaneseq
        %v718 = vshrl.u32 %v717, 7
        %v719 = vsub.s32 %v716, %v718
        %v720 = vrot.slane %v706, %v719
        %v721 = vcombine.low %v713, %v720
        %v722 = vcombine.low %v515, %v522
        %v723 = vcombine.low %v529, %v536
        %v725 = vunpack.c.l.s4 1983009808
        %v726 = vunpack.c.0.s8 %v725
        %v727 = vlaneseq
        %v728 = vshrl.u32 %v727, 7
        %v729 = vsub.s32 %v726, %v728
        %v730 = vrot.slane %v722, %v729
        %v732 = vunpack.c.l.s4 1983009808
        %v733 = vunpack.c.0.s8 %v732
        %v734 = vlaneseq
        %v735 = vshrl.u32 %v734, 7
        %v736 = vsub.s32 %v733, %v735
        %v737 = vrot.slane %v723, %v736
        %v738 = vcombine.low %v730, %v737
        %v739 = vcombine.low %v543, %v550
        %v740 = vcombine.low %v557, %v564
        %v742 = vunpack.c.l.s4 1983009808
        %v743 = vunpack.c.0.s8 %v742
        %v744 = vlaneseq
        %v745 = vshrl.u32 %v744, 7
        %v746 = vsub.s32 %v743, %v745
        %v747 = vrot.slane %v739, %v746
        %v749 = vunpack.c.l.s4 1983009808
        %v750 = vunpack.c.0.s8 %v749
        %v751 = vlaneseq
        %v752 = vshrl.u32 %v751, 7
        %v753 = vsub.s32 %v750, %v752
        %v754 = vrot.slane %v740, %v753
        %v755 = vcombine.low %v747, %v754
        %v756 = vcombine.low %v571, %v578
        %v757 = vcombine.low %v585, %v592
        %v759 = vunpack.c.l.s4 1983009808
        %v760 = vunpack.c.0.s8 %v759
        %v761 = vlaneseq
        %v762 = vshrl.u32 %v761, 7
        %v763 = vsub.s32 %v760, %v762
        %v764 = vrot.slane %v756, %v763
        %v766 = vunpack.c.l.s4 1983009808
        %v767 = vunpack.c.0.s8 %v766
        %v768 = vlaneseq
        %v769 = vshrl.u32 %v768, 7
        %v770 = vsub.s32 %v767, %v769
        %v771 = vrot.slane %v757, %v770
        %v772 = vcombine.low %v764, %v771
        %v773 = vcombine.low %v599, %v606
        %v774 = vcombine.low %v613, %v620
        %v776 = vunpack.c.l.s4 1983009808
        %v777 = vunpack.c.0.s8 %v776
        %v778 = vlaneseq
        %v779 = vshrl.u32 %v778, 7
        %v780 = vsub.s32 %v777, %v779
        %v781 = vrot.slane %v773, %v780
        %v783 = vunpack.c.l.s4 1983009808
        %v784 = vunpack.c.0.s8 %v783
        %v785 = vlaneseq
        %v786 = vshrl.u32 %v785, 7
        %v787 = vsub.s32 %v784, %v786
        %v788 = vrot.slane %v774, %v787
        %v789 = vcombine.low %v781, %v788
        %v790 = vcombine.low %v627, %v634
        %v791 = vcombine.low %v641, %v648
        %v793 = vunpack.c.l.s4 1983009808
        %v794 = vunpack.c.0.s8 %v793
        %v795 = vlaneseq
        %v796 = vshrl.u32 %v795, 7
        %v797 = vsub.s32 %v794, %v796
        %v798 = vrot.slane %v790, %v797
        %v800 = vunpack.c.l.s4 1983009808
        %v801 = vunpack.c.0.s8 %v800
        %v802 = vlaneseq
        %v803 = vshrl.u32 %v802, 7
        %v804 = vsub.s32 %v801, %v803
        %v805 = vrot.slane %v791, %v804
        %v806 = vcombine.low %v798, %v805
        %v807 = vcombine.low %v655, %v662
        %v808 = vcombine.low %v669, %v676
        %v810 = vunpack.c.l.s4 1983009808
        %v811 = vunpack.c.0.s8 %v810
        %v812 = vlaneseq
        %v813 = vshrl.u32 %v812, 7
        %v814 = vsub.s32 %v811, %v813
        %v815 = vrot.slane %v807, %v814
        %v817 = vunpack.c.l.s4 1983009808
        %v818 = vunpack.c.0.s8 %v817
        %v819 = vlaneseq
        %v820 = vshrl.u32 %v819, 7
        %v821 = vsub.s32 %v818, %v820
        %v822 = vrot.slane %v808, %v821
        %v823 = vcombine.low %v815, %v822
        %v824 = vcombine.low %v683, %v690
        %v825 = vcombine.low %v697, %v704
        %v827 = vunpack.c.l.s4 1983009808
        %v828 = vunpack.c.0.s8 %v827
        %v829 = vlaneseq
        %v830 = vshrl.u32 %v829, 7
        %v831 = vsub.s32 %v828, %v830
        %v832 = vrot.slane %v824, %v831
        %v834 = vunpack.c.l.s4 1983009808
        %v835 = vunpack.c.0.s8 %v834
        %v836 = vlaneseq
        %v837 = vshrl.u32 %v836, 7
        %v838 = vsub.s32 %v835, %v837
        %v839 = vrot.slane %v825, %v838
        %v840 = vcombine.low %v832, %v839
        %841 = vset.pattern.permute.xlu0 0
        %842 = vperm.xlu0 %841, %v721
        %v843 = vpop.permute.xlu0 %842
        %844 = vset.pattern.permute.xlu0 0
        %845 = vperm.xlu0 %844, %v738
        %v846 = vpop.permute.xlu0 %845
        %847 = vset.pattern.permute.xlu0 0
        %848 = vperm.xlu0 %847, %v755
        %v849 = vpop.permute.xlu0 %848
        %850 = vset.pattern.permute.xlu0 0
        %851 = vperm.xlu0 %850, %v772
        %v852 = vpop.permute.xlu0 %851
        %853 = vset.pattern.permute.xlu0 0
        %854 = vperm.xlu0 %853, %v789
        %v855 = vpop.permute.xlu0 %854
        %856 = vset.pattern.permute.xlu0 0
        %857 = vperm.xlu0 %856, %v806
        %v858 = vpop.permute.xlu0 %857
        %859 = vset.pattern.permute.xlu0 0
        %860 = vperm.xlu0 %859, %v823
        %v861 = vpop.permute.xlu0 %860
        %862 = vset.pattern.permute.xlu0 0
        %863 = vperm.xlu0 %862, %v840
        %v864 = vpop.permute.xlu0 %863
        %v865 = vlaneseq
        %v866 = vand.u32 %v865, 127
        %v867 = vlaneseq
        %v868 = vshrl.u32 %v867, 7
        %v869 = vsub.s32 %v866, %v868
        %v870 = vrot.slane %v843, %v869
        %v871 = vadd.s32 %v866, 4294967288
        %v872 = vlaneseq
        %v873 = vshrl.u32 %v872, 7
        %v874 = vsub.s32 %v871, %v873
        %v875 = vrot.slane %v846, %v874
        %vm876 = vcmask 130112
        %v877 = vsel %vm876, %v875, %v870
        %v878 = vadd.s32 %v866, 4294967280
        %v879 = vlaneseq
        %v880 = vshrl.u32 %v879, 7
        %v881 = vsub.s32 %v878, %v880
        %v882 = vrot.slane %v849, %v881
        %vm883 = vcmask 195712
        %v884 = vsel %vm883, %v882, %v877
        %v885 = vadd.s32 %v866, 4294967272
        %v886 = vlaneseq
        %v887 = vshrl.u32 %v886, 7
        %v888 = vsub.s32 %v885, %v887
        %v889 = vrot.slane %v852, %v888
        %vm890 = vcmask 261312
        %v891 = vsel %vm890, %v889, %v884
        %v892 = vlaneseq
        %v893 = vshrl.u32 %v892, 7
        %v894 = vsub.s32 %v866, %v893
        %v895 = vrot.slane %v855, %v894
        %v896 = vlaneseq
        %v897 = vshrl.u32 %v896, 7
        %v898 = vsub.s32 %v871, %v897
        %v899 = vrot.slane %v858, %v898
        %v900 = vsel %vm876, %v899, %v895
        %v901 = vlaneseq
        %v902 = vshrl.u32 %v901, 7
        %v903 = vsub.s32 %v878, %v902
        %v904 = vrot.slane %v861, %v903
        %v905 = vsel %vm883, %v904, %v900
        %v906 = vlaneseq
        %v907 = vshrl.u32 %v906, 7
        %v908 = vsub.s32 %v885, %v907
        %v909 = vrot.slane %v864, %v908
        %v910 = vsel %vm890, %v909, %v905
        %vm911 = vcmask 1041409
        %v912 = vsel %vm911, %v910, %v891
        %v914 = vunpack.c.l.s4 1983009808
        %v915 = vunpack.c.0.s8 %v914
        %v916 = vlaneseq
        %v917 = vshrl.u32 %v916, 7
        %v918 = vsub.s32 %v915, %v917
        %v919 = vrot.slane %v912, %v918
        %v921 = vmax.f32 %v472, %v919
        %vm922 = vcmask 254976
        %923 = vst.msk [vmem:[#allocation2] sm:$0x3] %vm922, %v921
        %v924 = vld [vmem:[#allocation8] sm:$0xf]
        %v925 = vld [vmem:[#allocation8 + $0x4] sm:$0xf]
        %v926 = vld [vmem:[#allocation8 + $0x8] sm:$0xf]
        %v927 = vld [vmem:[#allocation8 + $0xc] sm:$0xf]
        %v928 = vld [vmem:[#allocation8 + $0x10] sm:$0xf]
        %v929 = vld [vmem:[#allocation8 + $0x14] sm:$0xf]
        %v930 = vld [vmem:[#allocation8 + $0x18] sm:$0xf]
        %v931 = vld [vmem:[#allocation8 + $0x1c] sm:$0xf]
        %v932 = vunpack.c.l.bf16 %v924
        %v933 = vunpack.c.l.bf16 %v925
        %v934 = vunpack.c.l.bf16 %v926
        %v935 = vunpack.c.l.bf16 %v927
        %v936 = vunpack.c.l.bf16 %v928
        %v937 = vunpack.c.l.bf16 %v929
        %v938 = vunpack.c.l.bf16 %v930
        %v939 = vunpack.c.l.bf16 %v931
        %vm940 = vcmask 523264
        %v941 = vsel %vm940, %v932, -inf
        %942 = vmax.xlane.f32.xlu0 %v941
        %v943 = vpop.xlane.xlu0 %942
        %v944 = vsel %vm940, %v933, -inf
        %945 = vmax.xlane.f32.xlu0 %v944
        %v946 = vpop.xlane.xlu0 %945
        %v947 = vsel %vm940, %v934, -inf
        %948 = vmax.xlane.f32.xlu0 %v947
        %v949 = vpop.xlane.xlu0 %948
        %v950 = vsel %vm940, %v935, -inf
        %951 = vmax.xlane.f32.xlu0 %v950
        %v952 = vpop.xlane.xlu0 %951
        %v953 = vsel %vm940, %v936, -inf
        %954 = vmax.xlane.f32.xlu0 %v953
        %v955 = vpop.xlane.xlu0 %954
        %v956 = vsel %vm940, %v937, -inf
        %957 = vmax.xlane.f32.xlu0 %v956
        %v958 = vpop.xlane.xlu0 %957
        %v959 = vsel %vm940, %v938, -inf
        %960 = vmax.xlane.f32.xlu0 %v959
        %v961 = vpop.xlane.xlu0 %960
        %v962 = vsel %vm940, %v939, -inf
        %963 = vmax.xlane.f32.xlu0 %v962
        %v964 = vpop.xlane.xlu0 %963
        %v965 = vld [vmem:[#allocation2 + $0x2] sm:$0x3]
        %v975 = vunpack.c.l.s4 269488144
        %v976 = vunpack.c.0.s8 %v975
        %v977 = vlaneseq
        %v978 = vshrl.u32 %v977, 7
        %v979 = vsub.s32 %v976, %v978
        %v980 = vrot.slane %v943, %v979
        %v982 = vunpack.c.l.s4 842150450
        %v983 = vunpack.c.0.s8 %v982
        %v984 = vlaneseq
        %v985 = vshrl.u32 %v984, 7
        %v986 = vsub.s32 %v983, %v985
        %v987 = vrot.slane %v943, %v986
        %v989 = vunpack.c.l.s4 1414812756
        %v990 = vunpack.c.0.s8 %v989
        %v991 = vlaneseq
        %v992 = vshrl.u32 %v991, 7
        %v993 = vsub.s32 %v990, %v992
        %v994 = vrot.slane %v943, %v993
        %v996 = vunpack.c.l.s4 1987475062
        %v997 = vunpack.c.0.s8 %v996
        %v998 = vlaneseq
        %v999 = vshrl.u32 %v998, 7
        %v1000 = vsub.s32 %v997, %v999
        %v1001 = vrot.slane %v943, %v1000
        %v1003 = vunpack.c.l.s4 269488144
        %v1004 = vunpack.c.0.s8 %v1003
        %v1005 = vlaneseq
        %v1006 = vshrl.u32 %v1005, 7
        %v1007 = vsub.s32 %v1004, %v1006
        %v1008 = vrot.slane %v946, %v1007
        %v1010 = vunpack.c.l.s4 842150450
        %v1011 = vunpack.c.0.s8 %v1010
        %v1012 = vlaneseq
        %v1013 = vshrl.u32 %v1012, 7
        %v1014 = vsub.s32 %v1011, %v1013
        %v1015 = vrot.slane %v946, %v1014
        %v1017 = vunpack.c.l.s4 1414812756
        %v1018 = vunpack.c.0.s8 %v1017
        %v1019 = vlaneseq
        %v1020 = vshrl.u32 %v1019, 7
        %v1021 = vsub.s32 %v1018, %v1020
        %v1022 = vrot.slane %v946, %v1021
        %v1024 = vunpack.c.l.s4 1987475062
        %v1025 = vunpack.c.0.s8 %v1024
        %v1026 = vlaneseq
        %v1027 = vshrl.u32 %v1026, 7
        %v1028 = vsub.s32 %v1025, %v1027
        %v1029 = vrot.slane %v946, %v1028
        %v1031 = vunpack.c.l.s4 269488144
        %v1032 = vunpack.c.0.s8 %v1031
        %v1033 = vlaneseq
        %v1034 = vshrl.u32 %v1033, 7
        %v1035 = vsub.s32 %v1032, %v1034
        %v1036 = vrot.slane %v949, %v1035
        %v1038 = vunpack.c.l.s4 842150450
        %v1039 = vunpack.c.0.s8 %v1038
        %v1040 = vlaneseq
        %v1041 = vshrl.u32 %v1040, 7
        %v1042 = vsub.s32 %v1039, %v1041
        %v1043 = vrot.slane %v949, %v1042
        %v1045 = vunpack.c.l.s4 1414812756
        %v1046 = vunpack.c.0.s8 %v1045
        %v1047 = vlaneseq
        %v1048 = vshrl.u32 %v1047, 7
        %v1049 = vsub.s32 %v1046, %v1048
        %v1050 = vrot.slane %v949, %v1049
        %v1052 = vunpack.c.l.s4 1987475062
        %v1053 = vunpack.c.0.s8 %v1052
        %v1054 = vlaneseq
        %v1055 = vshrl.u32 %v1054, 7
        %v1056 = vsub.s32 %v1053, %v1055
        %v1057 = vrot.slane %v949, %v1056
        %v1059 = vunpack.c.l.s4 269488144
        %v1060 = vunpack.c.0.s8 %v1059
        %v1061 = vlaneseq
        %v1062 = vshrl.u32 %v1061, 7
        %v1063 = vsub.s32 %v1060, %v1062
        %v1064 = vrot.slane %v952, %v1063
        %v1066 = vunpack.c.l.s4 842150450
        %v1067 = vunpack.c.0.s8 %v1066
        %v1068 = vlaneseq
        %v1069 = vshrl.u32 %v1068, 7
        %v1070 = vsub.s32 %v1067, %v1069
        %v1071 = vrot.slane %v952, %v1070
        %v1073 = vunpack.c.l.s4 1414812756
        %v1074 = vunpack.c.0.s8 %v1073
        %v1075 = vlaneseq
        %v1076 = vshrl.u32 %v1075, 7
        %v1077 = vsub.s32 %v1074, %v1076
        %v1078 = vrot.slane %v952, %v1077
        %v1080 = vunpack.c.l.s4 1987475062
        %v1081 = vunpack.c.0.s8 %v1080
        %v1082 = vlaneseq
        %v1083 = vshrl.u32 %v1082, 7
        %v1084 = vsub.s32 %v1081, %v1083
        %v1085 = vrot.slane %v952, %v1084
        %v1087 = vunpack.c.l.s4 269488144
        %v1088 = vunpack.c.0.s8 %v1087
        %v1089 = vlaneseq
        %v1090 = vshrl.u32 %v1089, 7
        %v1091 = vsub.s32 %v1088, %v1090
        %v1092 = vrot.slane %v955, %v1091
        %v1094 = vunpack.c.l.s4 842150450
        %v1095 = vunpack.c.0.s8 %v1094
        %v1096 = vlaneseq
        %v1097 = vshrl.u32 %v1096, 7
        %v1098 = vsub.s32 %v1095, %v1097
        %v1099 = vrot.slane %v955, %v1098
        %v1101 = vunpack.c.l.s4 1414812756
        %v1102 = vunpack.c.0.s8 %v1101
        %v1103 = vlaneseq
        %v1104 = vshrl.u32 %v1103, 7
        %v1105 = vsub.s32 %v1102, %v1104
        %v1106 = vrot.slane %v955, %v1105
        %v1108 = vunpack.c.l.s4 1987475062
        %v1109 = vunpack.c.0.s8 %v1108
        %v1110 = vlaneseq
        %v1111 = vshrl.u32 %v1110, 7
        %v1112 = vsub.s32 %v1109, %v1111
        %v1113 = vrot.slane %v955, %v1112
        %v1115 = vunpack.c.l.s4 269488144
        %v1116 = vunpack.c.0.s8 %v1115
        %v1117 = vlaneseq
        %v1118 = vshrl.u32 %v1117, 7
        %v1119 = vsub.s32 %v1116, %v1118
        %v1120 = vrot.slane %v958, %v1119
        %v1122 = vunpack.c.l.s4 842150450
        %v1123 = vunpack.c.0.s8 %v1122
        %v1124 = vlaneseq
        %v1125 = vshrl.u32 %v1124, 7
        %v1126 = vsub.s32 %v1123, %v1125
        %v1127 = vrot.slane %v958, %v1126
        %v1129 = vunpack.c.l.s4 1414812756
        %v1130 = vunpack.c.0.s8 %v1129
        %v1131 = vlaneseq
        %v1132 = vshrl.u32 %v1131, 7
        %v1133 = vsub.s32 %v1130, %v1132
        %v1134 = vrot.slane %v958, %v1133
        %v1136 = vunpack.c.l.s4 1987475062
        %v1137 = vunpack.c.0.s8 %v1136
        %v1138 = vlaneseq
        %v1139 = vshrl.u32 %v1138, 7
        %v1140 = vsub.s32 %v1137, %v1139
        %v1141 = vrot.slane %v958, %v1140
        %v1143 = vunpack.c.l.s4 269488144
        %v1144 = vunpack.c.0.s8 %v1143
        %v1145 = vlaneseq
        %v1146 = vshrl.u32 %v1145, 7
        %v1147 = vsub.s32 %v1144, %v1146
        %v1148 = vrot.slane %v961, %v1147
        %v1150 = vunpack.c.l.s4 842150450
        %v1151 = vunpack.c.0.s8 %v1150
        %v1152 = vlaneseq
        %v1153 = vshrl.u32 %v1152, 7
        %v1154 = vsub.s32 %v1151, %v1153
        %v1155 = vrot.slane %v961, %v1154
        %v1157 = vunpack.c.l.s4 1414812756
        %v1158 = vunpack.c.0.s8 %v1157
        %v1159 = vlaneseq
        %v1160 = vshrl.u32 %v1159, 7
        %v1161 = vsub.s32 %v1158, %v1160
        %v1162 = vrot.slane %v961, %v1161
        %v1164 = vunpack.c.l.s4 1987475062
        %v1165 = vunpack.c.0.s8 %v1164
        %v1166 = vlaneseq
        %v1167 = vshrl.u32 %v1166, 7
        %v1168 = vsub.s32 %v1165, %v1167
        %v1169 = vrot.slane %v961, %v1168
        %v1171 = vunpack.c.l.s4 269488144
        %v1172 = vunpack.c.0.s8 %v1171
        %v1173 = vlaneseq
        %v1174 = vshrl.u32 %v1173, 7
        %v1175 = vsub.s32 %v1172, %v1174
        %v1176 = vrot.slane %v964, %v1175
        %v1178 = vunpack.c.l.s4 842150450
        %v1179 = vunpack.c.0.s8 %v1178
        %v1180 = vlaneseq
        %v1181 = vshrl.u32 %v1180, 7
        %v1182 = vsub.s32 %v1179, %v1181
        %v1183 = vrot.slane %v964, %v1182
        %v1185 = vunpack.c.l.s4 1414812756
        %v1186 = vunpack.c.0.s8 %v1185
        %v1187 = vlaneseq
        %v1188 = vshrl.u32 %v1187, 7
        %v1189 = vsub.s32 %v1186, %v1188
        %v1190 = vrot.slane %v964, %v1189
        %v1192 = vunpack.c.l.s4 1987475062
        %v1193 = vunpack.c.0.s8 %v1192
        %v1194 = vlaneseq
        %v1195 = vshrl.u32 %v1194, 7
        %v1196 = vsub.s32 %v1193, %v1195
        %v1197 = vrot.slane %v964, %v1196
        %v1198 = vcombine.low %v980, %v987
        %v1199 = vcombine.low %v994, %v1001
        %v1201 = vunpack.c.l.s4 1983009808
        %v1202 = vunpack.c.0.s8 %v1201
        %v1203 = vlaneseq
        %v1204 = vshrl.u32 %v1203, 7
        %v1205 = vsub.s32 %v1202, %v1204
        %v1206 = vrot.slane %v1198, %v1205
        %v1208 = vunpack.c.l.s4 1983009808
        %v1209 = vunpack.c.0.s8 %v1208
        %v1210 = vlaneseq
        %v1211 = vshrl.u32 %v1210, 7
        %v1212 = vsub.s32 %v1209, %v1211
        %v1213 = vrot.slane %v1199, %v1212
        %v1214 = vcombine.low %v1206, %v1213
        %v1215 = vcombine.low %v1008, %v1015
        %v1216 = vcombine.low %v1022, %v1029
        %v1218 = vunpack.c.l.s4 1983009808
        %v1219 = vunpack.c.0.s8 %v1218
        %v1220 = vlaneseq
        %v1221 = vshrl.u32 %v1220, 7
        %v1222 = vsub.s32 %v1219, %v1221
        %v1223 = vrot.slane %v1215, %v1222
        %v1225 = vunpack.c.l.s4 1983009808
        %v1226 = vunpack.c.0.s8 %v1225
        %v1227 = vlaneseq
        %v1228 = vshrl.u32 %v1227, 7
        %v1229 = vsub.s32 %v1226, %v1228
        %v1230 = vrot.slane %v1216, %v1229
        %v1231 = vcombine.low %v1223, %v1230
        %v1232 = vcombine.low %v1036, %v1043
        %v1233 = vcombine.low %v1050, %v1057
        %v1235 = vunpack.c.l.s4 1983009808
        %v1236 = vunpack.c.0.s8 %v1235
        %v1237 = vlaneseq
        %v1238 = vshrl.u32 %v1237, 7
        %v1239 = vsub.s32 %v1236, %v1238
        %v1240 = vrot.slane %v1232, %v1239
        %v1242 = vunpack.c.l.s4 1983009808
        %v1243 = vunpack.c.0.s8 %v1242
        %v1244 = vlaneseq
        %v1245 = vshrl.u32 %v1244, 7
        %v1246 = vsub.s32 %v1243, %v1245
        %v1247 = vrot.slane %v1233, %v1246
        %v1248 = vcombine.low %v1240, %v1247
        %v1249 = vcombine.low %v1064, %v1071
        %v1250 = vcombine.low %v1078, %v1085
        %v1252 = vunpack.c.l.s4 1983009808
        %v1253 = vunpack.c.0.s8 %v1252
        %v1254 = vlaneseq
        %v1255 = vshrl.u32 %v1254, 7
        %v1256 = vsub.s32 %v1253, %v1255
        %v1257 = vrot.slane %v1249, %v1256
        %v1259 = vunpack.c.l.s4 1983009808
        %v1260 = vunpack.c.0.s8 %v1259
        %v1261 = vlaneseq
        %v1262 = vshrl.u32 %v1261, 7
        %v1263 = vsub.s32 %v1260, %v1262
        %v1264 = vrot.slane %v1250, %v1263
        %v1265 = vcombine.low %v1257, %v1264
        %v1266 = vcombine.low %v1092, %v1099
        %v1267 = vcombine.low %v1106, %v1113
        %v1269 = vunpack.c.l.s4 1983009808
        %v1270 = vunpack.c.0.s8 %v1269
        %v1271 = vlaneseq
        %v1272 = vshrl.u32 %v1271, 7
        %v1273 = vsub.s32 %v1270, %v1272
        %v1274 = vrot.slane %v1266, %v1273
        %v1276 = vunpack.c.l.s4 1983009808
        %v1277 = vunpack.c.0.s8 %v1276
        %v1278 = vlaneseq
        %v1279 = vshrl.u32 %v1278, 7
        %v1280 = vsub.s32 %v1277, %v1279
        %v1281 = vrot.slane %v1267, %v1280
        %v1282 = vcombine.low %v1274, %v1281
        %v1283 = vcombine.low %v1120, %v1127
        %v1284 = vcombine.low %v1134, %v1141
        %v1286 = vunpack.c.l.s4 1983009808
        %v1287 = vunpack.c.0.s8 %v1286
        %v1288 = vlaneseq
        %v1289 = vshrl.u32 %v1288, 7
        %v1290 = vsub.s32 %v1287, %v1289
        %v1291 = vrot.slane %v1283, %v1290
        %v1293 = vunpack.c.l.s4 1983009808
        %v1294 = vunpack.c.0.s8 %v1293
        %v1295 = vlaneseq
        %v1296 = vshrl.u32 %v1295, 7
        %v1297 = vsub.s32 %v1294, %v1296
        %v1298 = vrot.slane %v1284, %v1297
        %v1299 = vcombine.low %v1291, %v1298
        %v1300 = vcombine.low %v1148, %v1155
        %v1301 = vcombine.low %v1162, %v1169
        %v1303 = vunpack.c.l.s4 1983009808
        %v1304 = vunpack.c.0.s8 %v1303
        %v1305 = vlaneseq
        %v1306 = vshrl.u32 %v1305, 7
        %v1307 = vsub.s32 %v1304, %v1306
        %v1308 = vrot.slane %v1300, %v1307
        %v1310 = vunpack.c.l.s4 1983009808
        %v1311 = vunpack.c.0.s8 %v1310
        %v1312 = vlaneseq
        %v1313 = vshrl.u32 %v1312, 7
        %v1314 = vsub.s32 %v1311, %v1313
        %v1315 = vrot.slane %v1301, %v1314
        %v1316 = vcombine.low %v1308, %v1315
        %v1317 = vcombine.low %v1176, %v1183
        %v1318 = vcombine.low %v1190, %v1197
        %v1320 = vunpack.c.l.s4 1983009808
        %v1321 = vunpack.c.0.s8 %v1320
        %v1322 = vlaneseq
        %v1323 = vshrl.u32 %v1322, 7
        %v1324 = vsub.s32 %v1321, %v1323
        %v1325 = vrot.slane %v1317, %v1324
        %v1327 = vunpack.c.l.s4 1983009808
        %v1328 = vunpack.c.0.s8 %v1327
        %v1329 = vlaneseq
        %v1330 = vshrl.u32 %v1329, 7
        %v1331 = vsub.s32 %v1328, %v1330
        %v1332 = vrot.slane %v1318, %v1331
        %v1333 = vcombine.low %v1325, %v1332
        %1334 = vset.pattern.permute.xlu0 0
        %1335 = vperm.xlu0 %1334, %v1214
        %v1336 = vpop.permute.xlu0 %1335
        %1337 = vset.pattern.permute.xlu0 0
        %1338 = vperm.xlu0 %1337, %v1231
        %v1339 = vpop.permute.xlu0 %1338
        %1340 = vset.pattern.permute.xlu0 0
        %1341 = vperm.xlu0 %1340, %v1248
        %v1342 = vpop.permute.xlu0 %1341
        %1343 = vset.pattern.permute.xlu0 0
        %1344 = vperm.xlu0 %1343, %v1265
        %v1345 = vpop.permute.xlu0 %1344
        %1346 = vset.pattern.permute.xlu0 0
        %1347 = vperm.xlu0 %1346, %v1282
        %v1348 = vpop.permute.xlu0 %1347
        %1349 = vset.pattern.permute.xlu0 0
        %1350 = vperm.xlu0 %1349, %v1299
        %v1351 = vpop.permute.xlu0 %1350
        %1352 = vset.pattern.permute.xlu0 0
        %1353 = vperm.xlu0 %1352, %v1316
        %v1354 = vpop.permute.xlu0 %1353
        %1355 = vset.pattern.permute.xlu0 0
        %1356 = vperm.xlu0 %1355, %v1333
        %v1357 = vpop.permute.xlu0 %1356
        %v1358 = vlaneseq
        %v1359 = vshrl.u32 %v1358, 7
        %v1360 = vsub.s32 %v866, %v1359
        %v1361 = vrot.slane %v1336, %v1360
        %v1362 = vlaneseq
        %v1363 = vshrl.u32 %v1362, 7
        %v1364 = vsub.s32 %v871, %v1363
        %v1365 = vrot.slane %v1339, %v1364
        %v1366 = vsel %vm876, %v1365, %v1361
        %v1367 = vlaneseq
        %v1368 = vshrl.u32 %v1367, 7
        %v1369 = vsub.s32 %v878, %v1368
        %v1370 = vrot.slane %v1342, %v1369
        %v1371 = vsel %vm883, %v1370, %v1366
        %v1372 = vlaneseq
        %v1373 = vshrl.u32 %v1372, 7
        %v1374 = vsub.s32 %v885, %v1373
        %v1375 = vrot.slane %v1345, %v1374
        %v1376 = vsel %vm890, %v1375, %v1371
        %v1377 = vlaneseq
        %v1378 = vshrl.u32 %v1377, 7
        %v1379 = vsub.s32 %v866, %v1378
        %v1380 = vrot.slane %v1348, %v1379
        %v1381 = vlaneseq
        %v1382 = vshrl.u32 %v1381, 7
        %v1383 = vsub.s32 %v871, %v1382
        %v1384 = vrot.slane %v1351, %v1383
        %v1385 = vsel %vm876, %v1384, %v1380
        %v1386 = vlaneseq
        %v1387 = vshrl.u32 %v1386, 7
        %v1388 = vsub.s32 %v878, %v1387
        %v1389 = vrot.slane %v1354, %v1388
        %v1390 = vsel %vm883, %v1389, %v1385
        %v1391 = vlaneseq
        %v1392 = vshrl.u32 %v1391, 7
        %v1393 = vsub.s32 %v885, %v1392
        %v1394 = vrot.slane %v1357, %v1393
        %v1395 = vsel %vm890, %v1394, %v1390
        %v1396 = vsel %vm911, %v1395, %v1376
        %v1398 = vunpack.c.l.s4 1983009808
        %v1399 = vunpack.c.0.s8 %v1398
        %v1400 = vlaneseq
        %v1401 = vshrl.u32 %v1400, 7
        %v1402 = vsub.s32 %v1399, %v1401
        %v1403 = vrot.slane %v1396, %v1402
        %v1405 = vmax.f32 %v965, %v1403
        %1406 = vst.msk [vmem:[#allocation2 + $0x2] sm:$0x3] %vm922, %v1405
        %p1407 = scmp.eq.s32.totalorder %s27, 3
        // Predicated region
        $region85: #{tpu_custom_call.1} parent=55 // pred_check
          %p1408 = pneg %p1407
        $region86: #{tpu_custom_call.1} parent=55 // pred_check_branch
          %1410 = sbr.rel (%p1408) target = $region88
        $region87: #{tpu_custom_call.1} parent=55 // pred_region
          %v1411 = vadd.s32 %v866, 128
          %vm1412 = vcmp.ge.s32.totalorder %v866, 0
          %vm1413 = vcmp.ge.s32.totalorder %v1411, 0
          %vm1414 = vcmp.lt.s32.totalorder %v866, 32
          %vm1415 = vcmp.lt.s32.totalorder %v1411, 32
          %vm1416 = vmand %vm1412, %vm1414
          %vm1417 = vmand %vm1413, %vm1415
          %vm1418 = vcmp.ge.s32.totalorder %v866, 128
          %vm1419 = vcmp.ge.s32.totalorder %v1411, 128
          %vm1420 = vcmp.lt.s32.totalorder %v866, 160
          %vm1421 = vcmp.lt.s32.totalorder %v1411, 160
          %vm1422 = vmand %vm1418, %vm1420
          %vm1423 = vmand %vm1419, %vm1421
          %vm1424 = vmor %vm1416, %vm1422
          %vm1425 = vmor %vm1417, %vm1423
          %v1426 = vld [vmem:[#allocation2] sm:$0xf]
          %v1427 = vsel %vm1424, 1, 0
          %v1428 = vsel %vm1425, 1, 0
          %vm1429 = vcmp.eq.s32.totalorder %v1427, 1
          %vm1430 = vcmp.eq.s32.totalorder %v1428, 1
          %v1433 = vunpack.c.l.s4 1983009808
          %v1434 = vunpack.c.0.s8 %v1433
          %v1435 = vlaneseq
          %v1436 = vshrl.u32 %v1435, 7
          %v1437 = vsub.s32 %v1434, %v1436
          %v1438 = vrot.slane %v1426, %v1437
          %v1439 = vcombine.high %v1438, %v1438
          %v1442 = vsel %vm1429, %v1438, 0.0
          %v1443 = vsel %vm1430, %v1439, 0.0
          %v1444 = vpack.c.bf16 %v1442, %v1442
          %v1445 = vpack.c.bf16 %v1443, %v1443
          %v1446 = vld [vmem:[#allocation10] sm:$0xf]
          %v1447 = vld [vmem:[#allocation10 + $0x4] sm:$0xf]
          %v1448 = vld [vmem:[#allocation10 + $0x8] sm:$0xf]
          %v1449 = vld [vmem:[#allocation10 + $0xc] sm:$0xf]
          %v1450 = vld [vmem:[#allocation10 + $0x10] sm:$0xf]
          %v1451 = vld [vmem:[#allocation10 + $0x14] sm:$0xf]
          %v1452 = vld [vmem:[#allocation10 + $0x18] sm:$0xf]
          %v1453 = vld [vmem:[#allocation10 + $0x1c] sm:$0xf]
          %v1454 = vld [vmem:[#allocation10 + $0x20] sm:$0xf]
          %v1455 = vld [vmem:[#allocation10 + $0x24] sm:$0xf]
          %v1456 = vld [vmem:[#allocation10 + $0x28] sm:$0xf]
          %v1457 = vld [vmem:[#allocation10 + $0x2c] sm:$0xf]
          %v1458 = vld [vmem:[#allocation10 + $0x30] sm:$0xf]
          %v1459 = vld [vmem:[#allocation10 + $0x34] sm:$0xf]
          %v1460 = vld [vmem:[#allocation10 + $0x38] sm:$0xf]
          %v1461 = vld [vmem:[#allocation10 + $0x3c] sm:$0xf]
          %v1462 = vld [vmem:[#allocation10 + $0x40] sm:$0xf]
          %v1463 = vld [vmem:[#allocation10 + $0x44] sm:$0xf]
          %v1464 = vld [vmem:[#allocation10 + $0x48] sm:$0xf]
          %v1465 = vld [vmem:[#allocation10 + $0x4c] sm:$0xf]
          %v1466 = vld [vmem:[#allocation10 + $0x50] sm:$0xf]
          %v1467 = vld [vmem:[#allocation10 + $0x54] sm:$0xf]
          %v1468 = vld [vmem:[#allocation10 + $0x58] sm:$0xf]
          %v1469 = vld [vmem:[#allocation10 + $0x5c] sm:$0xf]
          %v1470 = vld [vmem:[#allocation10 + $0x60] sm:$0xf]
          %v1471 = vld [vmem:[#allocation10 + $0x64] sm:$0xf]
          %v1472 = vld [vmem:[#allocation10 + $0x68] sm:$0xf]
          %v1473 = vld [vmem:[#allocation10 + $0x6c] sm:$0xf]
          %v1474 = vld [vmem:[#allocation10 + $0x70] sm:$0xf]
          %v1475 = vld [vmem:[#allocation10 + $0x74] sm:$0xf]
          %v1476 = vld [vmem:[#allocation10 + $0x78] sm:$0xf]
          %v1477 = vld [vmem:[#allocation10 + $0x7c] sm:$0xf]
          %v1478 = vld [vmem:[%s4] sm:$0x1]
          %v1480 = vlaneseq
          %v1481 = vshrl.u32 %v1480, 7
          %v1482 = vsub.s32 0, %v1481
          %v1483 = vrot.slane %v1478, %v1482
          %v1517 = vunpack.c.l.b16 %v1446
          %v1518 = vunpack.c.l.b16 %v1447
          %v1519 = vunpack.c.l.b16 %v1448
          %v1520 = vunpack.c.l.b16 %v1449
          %v1521 = vunpack.c.l.b16 %v1450
          %v1522 = vunpack.c.l.b16 %v1451
          %v1523 = vunpack.c.l.b16 %v1452
          %v1524 = vunpack.c.l.b16 %v1453
          %v1525 = vunpack.c.l.b16 %v1454
          %v1526 = vunpack.c.l.b16 %v1455
          %v1527 = vunpack.c.l.b16 %v1456
          %v1528 = vunpack.c.l.b16 %v1457
          %v1529 = vunpack.c.l.b16 %v1458
          %v1530 = vunpack.c.l.b16 %v1459
          %v1531 = vunpack.c.l.b16 %v1460
          %v1532 = vunpack.c.l.b16 %v1461
          %v1533 = vunpack.c.l.b16 %v1462
          %v1534 = vunpack.c.l.b16 %v1463
          %v1535 = vunpack.c.l.b16 %v1464
          %v1536 = vunpack.c.l.b16 %v1465
          %v1537 = vunpack.c.l.b16 %v1466
          %v1538 = vunpack.c.l.b16 %v1467
          %v1539 = vunpack.c.l.b16 %v1468
          %v1540 = vunpack.c.l.b16 %v1469
          %v1541 = vunpack.c.l.b16 %v1470
          %v1542 = vunpack.c.l.b16 %v1471
          %v1543 = vunpack.c.l.b16 %v1472
          %v1544 = vunpack.c.l.b16 %v1473
          %v1545 = vunpack.c.l.b16 %v1474
          %v1546 = vunpack.c.l.b16 %v1475
          %v1547 = vunpack.c.l.b16 %v1476
          %v1548 = vunpack.c.l.b16 %v1477
          %v1549 = vpack.c.b16 %v1518, %v1517
          %v1550 = vpack.c.b16 %v1520, %v1519
          %v1551 = vpack.c.b16 %v1522, %v1521
          %v1552 = vpack.c.b16 %v1524, %v1523
          %v1553 = vpack.c.b16 %v1526, %v1525
          %v1554 = vpack.c.b16 %v1528, %v1527
          %v1555 = vpack.c.b16 %v1530, %v1529
          %v1556 = vpack.c.b16 %v1532, %v1531
          %v1557 = vpack.c.b16 %v1534, %v1533
          %v1558 = vpack.c.b16 %v1536, %v1535
          %v1559 = vpack.c.b16 %v1538, %v1537
          %v1560 = vpack.c.b16 %v1540, %v1539
          %v1561 = vpack.c.b16 %v1542, %v1541
          %v1562 = vpack.c.b16 %v1544, %v1543
          %v1563 = vpack.c.b16 %v1546, %v1545
          %v1564 = vpack.c.b16 %v1548, %v1547
          %1581 = vmatprep.subr.bf16.mxu0 0
          %1582 = vmatpush1.bf16.msra.mxu0 %v1549
          %1583 = vmatprep.subr.bf16.mxu0 0
          %1584 = vmatpush1.bf16.msra.mxu0 %v1550
          %1585 = vmatprep.subr.bf16.mxu0 0
          %1586 = vmatpush1.bf16.msra.mxu0 %v1551
          %1587 = vmatprep.subr.bf16.mxu0 0
          %1588 = vmatpush1.bf16.msra.mxu0 %v1552
          %1589 = vmatprep.subr.bf16.mxu0 0
          %1590 = vmatpush1.bf16.msra.mxu0 %v1553
          %1591 = vmatprep.subr.bf16.mxu0 0
          %1592 = vmatpush1.bf16.msra.mxu0 %v1554
          %1593 = vmatprep.subr.bf16.mxu0 0
          %1594 = vmatpush1.bf16.msra.mxu0 %v1555
          %1595 = vmatprep.subr.bf16.mxu0 0
          %1596 = vmatpush1.bf16.msra.mxu0 %v1556
          %1597 = vmatprep.subr.bf16.mxu0 0
          %1598 = vmatpush1.bf16.msra.mxu0 %v1557
          %1599 = vmatprep.subr.bf16.mxu0 0
          %1600 = vmatpush1.bf16.msra.mxu0 %v1558
          %1601 = vmatprep.subr.bf16.mxu0 0
          %1602 = vmatpush1.bf16.msra.mxu0 %v1559
          %1603 = vmatprep.subr.bf16.mxu0 0
          %1604 = vmatpush1.bf16.msra.mxu0 %v1560
          %1605 = vmatprep.subr.bf16.mxu0 0
          %1606 = vmatpush1.bf16.msra.mxu0 %v1561
          %1607 = vmatprep.subr.bf16.mxu0 0
          %1608 = vmatpush1.bf16.msra.mxu0 %v1562
          %1609 = vmatprep.subr.bf16.mxu0 0
          %1610 = vmatpush1.bf16.msra.mxu0 %v1563
          %1611 = vmatprep.subr.bf16.mxu0 0
          %1612 = vmatpush1.bf16.msra.mxu0 %v1564
          %1613 = vmatprep.mubr.bf16.mxu0 %v1445
          %1614 = vmatmul.mubr.bf16.gmra.mrb[0].mxu0 %v1444
          %v1615 = vpop.f32.mrb[0].mxu0
          %v1616 = vadd.f32 %v1483, %v1615
          %v1617 = vpop.f32.mrb[0].mxu0
          %v1618 = vpop.f32.mrb[0].mxu0
          %v1619 = vpop.f32.mrb[0].mxu0
          %1620 = vdwg.mxu0
          %v1621 = vpack.c.bf16 %v1616, %v1616
          %v1622 = vld [vmem:[#allocation11] sm:$0xff]
          %v1623 = vld [vmem:[#allocation11 + $0x8] sm:$0xff]
          %v1624 = vld [vmem:[#allocation11 + $0x10] sm:$0xff]
          %v1625 = vld [vmem:[#allocation11 + $0x18] sm:$0xff]
          %v1626 = vld [vmem:[#allocation11 + $0x20] sm:$0xff]
          %v1627 = vld [vmem:[#allocation11 + $0x28] sm:$0xff]
          %v1628 = vld [vmem:[#allocation11 + $0x30] sm:$0xff]
          %v1629 = vld [vmem:[#allocation11 + $0x38] sm:$0xff]
          %v1630 = vld [vmem:[#allocation11 + $0x40] sm:$0xff]
          %v1631 = vld [vmem:[#allocation11 + $0x48] sm:$0xff]
          %v1632 = vld [vmem:[#allocation11 + $0x50] sm:$0xff]
          %v1633 = vld [vmem:[#allocation11 + $0x58] sm:$0xff]
          %v1634 = vld [vmem:[#allocation11 + $0x60] sm:$0xff]
          %v1635 = vld [vmem:[#allocation11 + $0x68] sm:$0xff]
          %v1636 = vld [vmem:[#allocation11 + $0x70] sm:$0xff]
          %v1637 = vld [vmem:[#allocation11 + $0x78] sm:$0xff]
          %v1638 = vld [vmem:[%s6] sm:$0x3]
          %v1640 = vlaneseq
          %v1641 = vshrl.u32 %v1640, 7
          %v1642 = vsub.s32 0, %v1641
          %v1643 = vrot.slane %v1638, %v1642
          %v1644 = vlaneseq
          %v1645 = vshrl.u32 %v1644, 7
          %v1646 = vsub.s32 1, %v1645
          %v1647 = vrot.slane %v1638, %v1646
          %v1666 = vunpack.c.l.b16 %v1622
          %v1667 = vunpack.c.h.b16 %v1622
          %v1668 = vunpack.c.l.b16 %v1623
          %v1669 = vunpack.c.h.b16 %v1623
          %v1670 = vunpack.c.l.b16 %v1624
          %v1671 = vunpack.c.h.b16 %v1624
          %v1672 = vunpack.c.l.b16 %v1625
          %v1673 = vunpack.c.h.b16 %v1625
          %v1674 = vunpack.c.l.b16 %v1626
          %v1675 = vunpack.c.h.b16 %v1626
          %v1676 = vunpack.c.l.b16 %v1627
          %v1677 = vunpack.c.h.b16 %v1627
          %v1678 = vunpack.c.l.b16 %v1628
          %v1679 = vunpack.c.h.b16 %v1628
          %v1680 = vunpack.c.l.b16 %v1629
          %v1681 = vunpack.c.h.b16 %v1629
          %v1682 = vunpack.c.l.b16 %v1630
          %v1683 = vunpack.c.h.b16 %v1630
          %v1684 = vunpack.c.l.b16 %v1631
          %v1685 = vunpack.c.h.b16 %v1631
          %v1686 = vunpack.c.l.b16 %v1632
          %v1687 = vunpack.c.h.b16 %v1632
          %v1688 = vunpack.c.l.b16 %v1633
          %v1689 = vunpack.c.h.b16 %v1633
          %v1690 = vunpack.c.l.b16 %v1634
          %v1691 = vunpack.c.h.b16 %v1634
          %v1692 = vunpack.c.l.b16 %v1635
          %v1693 = vunpack.c.h.b16 %v1635
          %v1694 = vunpack.c.l.b16 %v1636
          %v1695 = vunpack.c.h.b16 %v1636
          %v1696 = vunpack.c.l.b16 %v1637
          %v1697 = vunpack.c.h.b16 %v1637
          %v1698 = vpack.c.b16 %v1668, %v1666
          %v1699 = vpack.c.b16 %v1669, %v1667
          %v1700 = vpack.c.b16 %v1672, %v1670
          %v1701 = vpack.c.b16 %v1673, %v1671
          %v1702 = vpack.c.b16 %v1676, %v1674
          %v1703 = vpack.c.b16 %v1677, %v1675
          %v1704 = vpack.c.b16 %v1680, %v1678
          %v1705 = vpack.c.b16 %v1681, %v1679
          %v1706 = vpack.c.b16 %v1684, %v1682
          %v1707 = vpack.c.b16 %v1685, %v1683
          %v1708 = vpack.c.b16 %v1688, %v1686
          %v1709 = vpack.c.b16 %v1689, %v1687
          %v1710 = vpack.c.b16 %v1692, %v1690
          %v1711 = vpack.c.b16 %v1693, %v1691
          %v1712 = vpack.c.b16 %v1696, %v1694
          %v1713 = vpack.c.b16 %v1697, %v1695
          %1730 = vmatprep.subr.bf16.mxu0 %v1699
          %1731 = vmatpush1.bf16.msra.mxu0 %v1698
          %1732 = vmatprep.subr.bf16.mxu0 %v1701
          %1733 = vmatpush1.bf16.msra.mxu0 %v1700
          %1734 = vmatprep.subr.bf16.mxu0 %v1703
          %1735 = vmatpush1.bf16.msra.mxu0 %v1702
          %1736 = vmatprep.subr.bf16.mxu0 %v1705
          %1737 = vmatpush1.bf16.msra.mxu0 %v1704
          %1738 = vmatprep.subr.bf16.mxu0 %v1707
          %1739 = vmatpush1.bf16.msra.mxu0 %v1706
          %1740 = vmatprep.subr.bf16.mxu0 %v1709
          %1741 = vmatpush1.bf16.msra.mxu0 %v1708
          %1742 = vmatprep.subr.bf16.mxu0 %v1711
          %1743 = vmatpush1.bf16.msra.mxu0 %v1710
          %1744 = vmatprep.subr.bf16.mxu0 %v1713
          %1745 = vmatpush1.bf16.msra.mxu0 %v1712
          %1746 = vmatprep.subr.bf16.mxu0 0
          %1747 = vmatpush1.bf16.msra.mxu0 0
          %1748 = vmatprep.subr.bf16.mxu0 0
          %1749 = vmatpush1.bf16.msra.mxu0 0
          %1750 = vmatprep.subr.bf16.mxu0 0
          %1751 = vmatpush1.bf16.msra.mxu0 0
          %1752 = vmatprep.subr.bf16.mxu0 0
          %1753 = vmatpush1.bf16.msra.mxu0 0
          %1754 = vmatprep.subr.bf16.mxu0 0
          %1755 = vmatpush1.bf16.msra.mxu0 0
          %1756 = vmatprep.subr.bf16.mxu0 0
          %1757 = vmatpush1.bf16.msra.mxu0 0
          %1758 = vmatprep.subr.bf16.mxu0 0
          %1759 = vmatpush1.bf16.msra.mxu0 0
          %1760 = vmatprep.subr.bf16.mxu0 0
          %1761 = vmatpush1.bf16.msra.mxu0 0
          %1762 = vmatprep.mubr.bf16.mxu0 0
          %1763 = vmatmul.mubr.bf16.gmra.mrb[0].mxu0 %v1621
          %v1764 = vpop.f32.mrb[0].mxu0
          %v1765 = vadd.f32 %v1643, %v1764
          %v1766 = vpop.f32.mrb[0].mxu0
          %v1767 = vadd.f32 %v1647, %v1766
          %v1768 = vpop.f32.mrb[0].mxu0
          %v1769 = vpop.f32.mrb[0].mxu0
          %1770 = vdwg.mxu0
          %v1771 = vmul.f32 %v1765, %v1765
          %vm1772 = vcmask 1041408
          %v1773 = vsel %vm1772, %v1771, 0.0
          %1774 = vadd.xlane.f32.xlu0 %v1773
          %v1775 = vpop.xlane.xlu0 %1774
          %v1776 = vmax.f32 %v1775, 1e-24
          %v1777 = vrsqrt.pop %v1776
          %v1778 = vmul.f32 %v1765, %v1777
          %v1779 = vmul.f32 %v1767, %v1767
          %v1780 = vsel %vm1772, %v1779, 0.0
          %1781 = vadd.xlane.f32.xlu0 %v1780
          %v1782 = vpop.xlane.xlu0 %1781
          %v1783 = vmax.f32 %v1782, 1e-24
          %v1784 = vrsqrt.pop %v1783
          %v1785 = vmul.f32 %v1767, %v1784
          %v1787 = vrot.slane %v1785, 6
          %v1789 = vsel %vm1772, %v1778, %v1787
          %v1790 = vld [vmem:[#allocation13] sm:$0xff]
          %v1791 = vld [vmem:[#allocation13 + $0x8] sm:$0xff]
          %v1792 = vld [vmem:[#allocation13 + $0x10] sm:$0xff]
          %v1793 = vld [vmem:[#allocation13 + $0x18] sm:$0xff]
          %v1794 = vld [vmem:[#allocation13 + $0x20] sm:$0xff]
          %v1795 = vld [vmem:[#allocation13 + $0x28] sm:$0xff]
          %v1796 = vld [vmem:[#allocation13 + $0x30] sm:$0xff]
          %v1797 = vld [vmem:[#allocation13 + $0x38] sm:$0xff]
          %v1798 = vld [vmem:[#allocation13 + $0x40] sm:$0xff]
          %v1799 = vld [vmem:[#allocation13 + $0x48] sm:$0xff]
          %v1800 = vld [vmem:[#allocation13 + $0x50] sm:$0xff]
          %v1801 = vld [vmem:[#allocation13 + $0x58] sm:$0xff]
          %v1802 = vld [vmem:[#allocation13 + $0x60] sm:$0xff]
          %v1803 = vld [vmem:[#allocation13 + $0x68] sm:$0xff]
          %v1804 = vld [vmem:[#allocation13 + $0x70] sm:$0xff]
          %v1805 = vld [vmem:[#allocation13 + $0x78] sm:$0xff]
          %1806 = vmatprep.subr.mxu0 0.0
          %1807 = vmatpush1.msra.mxu0 %v1790
          %1808 = vmatprep.subr.mxu0 0.0
          %1809 = vmatpush1.msra.mxu0 %v1791
          %1810 = vmatprep.subr.mxu0 0.0
          %1811 = vmatpush1.msra.mxu0 %v1792
          %1812 = vmatprep.subr.mxu0 0.0
          %1813 = vmatpush1.msra.mxu0 %v1793
          %1814 = vmatprep.subr.mxu0 0.0
          %1815 = vmatpush1.msra.mxu0 %v1794
          %1816 = vmatprep.subr.mxu0 0.0
          %1817 = vmatpush1.msra.mxu0 %v1795
          %1818 = vmatprep.subr.mxu0 0.0
          %1819 = vmatpush1.msra.mxu0 %v1796
          %1820 = vmatprep.subr.mxu0 0.0
          %1821 = vmatpush1.msra.mxu0 %v1797
          %1822 = vmatprep.subr.mxu0 0.0
          %1823 = vmatpush1.msra.mxu0 %v1798
          %1824 = vmatprep.subr.mxu0 0.0
          %1825 = vmatpush1.msra.mxu0 %v1799
          %1826 = vmatprep.subr.mxu0 0.0
          %1827 = vmatpush1.msra.mxu0 %v1800
          %1828 = vmatprep.subr.mxu0 0.0
          %1829 = vmatpush1.msra.mxu0 %v1801
          %1830 = vmatprep.subr.mxu0 0.0
          %1831 = vmatpush1.msra.mxu0 %v1802
          %1832 = vmatprep.subr.mxu0 0.0
          %1833 = vmatpush1.msra.mxu0 %v1803
          %1834 = vmatprep.subr.mxu0 0.0
          %1835 = vmatpush1.msra.mxu0 %v1804
          %1836 = vmatprep.subr.mxu0 0.0
          %1837 = vmatpush1.msra.mxu0 %v1805
          %1838 = vmatprep.subr.mxu0 0.0
          %1839 = vmatpush1.msra.mxu0 0.0
          %1840 = vmatprep.subr.mxu0 0.0
          %1841 = vmatpush1.msra.mxu0 0.0
          %1842 = vmatprep.subr.mxu0 0.0
          %1843 = vmatpush1.msra.mxu0 0.0
          %1844 = vmatprep.subr.mxu0 0.0
          %1845 = vmatpush1.msra.mxu0 0.0
          %1846 = vmatprep.subr.mxu0 0.0
          %1847 = vmatpush1.msra.mxu0 0.0
          %1848 = vmatprep.subr.mxu0 0.0
          %1849 = vmatpush1.msra.mxu0 0.0
          %1850 = vmatprep.subr.mxu0 0.0
          %1851 = vmatpush1.msra.mxu0 0.0
          %1852 = vmatprep.subr.mxu0 0.0
          %1853 = vmatpush1.msra.mxu0 0.0
          %1854 = vmatprep.subr.mxu0 0.0
          %1855 = vmatpush1.msra.mxu0 0.0
          %1856 = vmatprep.subr.mxu0 0.0
          %1857 = vmatpush1.msra.mxu0 0.0
          %1858 = vmatprep.subr.mxu0 0.0
          %1859 = vmatpush1.msra.mxu0 0.0
          %1860 = vmatprep.subr.mxu0 0.0
          %1861 = vmatpush1.msra.mxu0 0.0
          %1862 = vmatprep.subr.mxu0 0.0
          %1863 = vmatpush1.msra.mxu0 0.0
          %1864 = vmatprep.subr.mxu0 0.0
          %1865 = vmatpush1.msra.mxu0 0.0
          %1866 = vmatprep.subr.mxu0 0.0
          %1867 = vmatpush1.msra.mxu0 0.0
          %1868 = vmatprep.subr.mxu0 0.0
          %1869 = vmatpush1.msra.mxu0 0.0
          %1870 = vmatprep.mubr.f32.mxu0 0.0
          %1871 = vmatmul.mubr.f32.gmra.mrb[0].mxu0 %v1789
          %v1872 = vpop.f32.mrb[0].mxu0
          %v1873 = vadd.f32 0.0, %v1872
          %v1874 = vpop.f32.mrb[0].mxu0
          %1875 = vdwg.mxu0
          %vm1876 = vcmp.lt.s32.totalorder %v866, 80
          %v1877 = vsel %vm1876, 1, 0
          %v1878 = vcvt.s32.f32 %v1877
          %v1879 = vmul.f32 %v1873, %v1878
          %v1880 = vsel %vm1772, %v1879, 0.0
          %1881 = vadd.xlane.f32.xlu0 %v1880
          %v1882 = vpop.xlane.xlu0 %1881
          %v1883 = vrot.slane %v1882, 4
          %v1884 = vadd.f32 %v1882, %v1883
          %v1885 = vrot.slane %v1884, 2
          %v1886 = vadd.f32 %v1884, %v1885
          %v1887 = vrot.slane %v1886, 1
          %v1888 = vadd.f32 %v1886, %v1887
          %s1889 = vtos %v1888
          %v1890 = vrcp.pop 160.0
          %s1891 = vtos %v1890
          %s1892 = smul.f32 %s1889, %s1891
          %v1893 = vstv %s1892
          %v1894 = vsub.f32 %v1873, %v1893
          %v1895 = vmul.f32 %v1894, %v1878
          %v1896 = vmul.f32 %v1895, %v1895
          %v1897 = vsel %vm1772, %v1896, 0.0
          %1898 = vadd.xlane.f32.xlu0 %v1897
          %v1899 = vpop.xlane.xlu0 %1898
          %v1900 = vrot.slane %v1899, 4
          %v1901 = vadd.f32 %v1899, %v1900
          %v1902 = vrot.slane %v1901, 2
          %v1903 = vadd.f32 %v1901, %v1902
          %v1904 = vrot.slane %v1903, 1
          %v1905 = vadd.f32 %v1903, %v1904
          %s1906 = vtos %v1905
          %v1907 = vrcp.pop 159.0
          %s1908 = vtos %v1907
          %s1909 = smul.f32 %s1906, %s1908
          %s1910 = smax.f32 %s1909, 1e-24
          %v1911 = vstv %s1910
          %v1912 = vrsqrt.pop %v1911
          %s1913 = vtos %v1912
          %v1914 = vstv %s1913
          %v1915 = vmul.f32 %v1894, %v1914
          %v1917 = vrot.slane %v1879, 2
          %v1919 = vsel %vm1772, %v1917, 0.0
          %1920 = vadd.xlane.f32.xlu0 %v1919
          %v1921 = vpop.xlane.xlu0 %1920
          %v1922 = vrot.slane %v1921, 4
          %v1923 = vadd.f32 %v1921, %v1922
          %v1924 = vrot.slane %v1923, 2
          %v1925 = vadd.f32 %v1923, %v1924
          %v1926 = vrot.slane %v1925, 1
          %v1927 = vadd.f32 %v1925, %v1926
          %s1928 = vtos %v1927
          %v1929 = vrcp.pop 160.0
          %s1930 = vtos %v1929
          %s1931 = smul.f32 %s1928, %s1930
          %v1932 = vstv %s1931
          %v1933 = vsub.f32 %v1873, %v1932
          %v1934 = vmul.f32 %v1933, %v1878
          %v1935 = vmul.f32 %v1934, %v1934
          %v1937 = vrot.slane %v1935, 2
          %v1939 = vsel %vm1772, %v1937, 0.0
          %1940 = vadd.xlane.f32.xlu0 %v1939
          %v1941 = vpop.xlane.xlu0 %1940
          %v1942 = vrot.slane %v1941, 4
          %v1943 = vadd.f32 %v1941, %v1942
          %v1944 = vrot.slane %v1943, 2
          %v1945 = vadd.f32 %v1943, %v1944
          %v1946 = vrot.slane %v1945, 1
          %v1947 = vadd.f32 %v1945, %v1946
          %s1948 = vtos %v1947
          %v1949 = vrcp.pop 159.0
          %s1950 = vtos %v1949
          %s1951 = smul.f32 %s1948, %s1950
          %s1952 = smax.f32 %s1951, 1e-24
          %v1953 = vstv %s1952
          %v1954 = vrsqrt.pop %v1953
          %s1955 = vtos %v1954
          %v1956 = vstv %s1955
          %v1957 = vmul.f32 %v1933, %v1956
          %v1958 = vmin.f32 %v1915, 0.0
          %v1959 = vand.u32 2147483647, %v1915
          %v1960 = vsub.f32 0.0, %v1959
          %v1961 = vmul.f32 %v1960, 1.442695
          %v1962 = vpow.pop %v1961
          %v1963 = vadd.f32 %v1962, 1.0
          %v1964 = vlog2.pop %v1963
          %v1965 = vmul.f32 %v1964, 0.6931472
          %v1966 = vsub.f32 %v1958, %v1965
          %v1967 = vmin.f32 %v1957, 0.0
          %v1968 = vand.u32 2147483647, %v1957
          %v1969 = vsub.f32 0.0, %v1968
          %v1970 = vmul.f32 %v1969, 1.442695
          %v1971 = vpow.pop %v1970
          %v1972 = vadd.f32 %v1971, 1.0
          %v1973 = vlog2.pop %v1972
          %v1974 = vmul.f32 %v1973, 0.6931472
          %v1975 = vsub.f32 %v1967, %v1974
          %s1976 = sld [smem:[#allocation3]]
          %s1977 = sld [smem:[#allocation3 + $0x1]]
          %v1978 = vstv %s1976
          %v1979 = vmul.f32 %v1978, %v1966
          %s1980 = ssub.f32 1.0, %s1976
          %v1981 = vstv %s1980
          %v1982 = vmul.f32 %v1981, %v1975
          %v1984 = vrot.slane %v1982, 2
          %v1986 = vadd.f32 %v1979, %v1984
          %v1987 = vmul.f32 %v1986, 1.442695
          %v1988 = vpow.pop %v1987
          %s1989 = ssub.f32 1.0, %s1977
          %v1990 = vstv %s1989
          %v1991 = vmul.f32 %v1990, %v1966
          %v1992 = vstv %s1977
          %v1993 = vmul.f32 %v1992, %v1975
          %v1995 = vrot.slane %v1993, 2
          %v1997 = vadd.f32 %v1991, %v1995
          %v1998 = vmul.f32 %v1997, 1.442695
          %v1999 = vpow.pop %v1998
          %v2000 = vld [vmem:[%s8] sm:$0x1]
          %vm2001 = vcmp.gt.f32.partialorder %v2000, 0.5
          %v2002 = vsel %vm2001, 1, 0
          %v2003 = vlaneseq
          %v2004 = vshrl.u32 %v2003, 7
          %v2005 = vsub.s32 0, %v2004
          %v2006 = vrot.slane %v2002, %v2005
          %vm2007 = vcmp.eq.s32.totalorder %v2006, 1
          %v2008 = vsel %vm2007, %v1999, %v1988
          %2009 = vst [vmem:[#allocation14] sm:$0x3] %v2008
        $region88: #{tpu_custom_call.1} parent=55 // pred_fallthru
          _
        // Predicated region
        $region89: #{tpu_custom_call.1} parent=55 // pred_check
          %p2010 = pneg %p238
        $region90: #{tpu_custom_call.1} parent=55 // pred_check_branch
          %2012 = sbr.rel (%p2010) target = $region92
        $region91: #{tpu_custom_call.1} parent=55 // pred_region
          %s2014 = ssub.s32 32, 32
          %2015 = vsyncadd [#allocation5], %s2014
          %s2017 = sshll.u32 [#allocation14], 4
          %s2018 = int_to_ptr.vmem [resolvable:$true] %s2017
          %2020 = dma.vmem_to_hbm [thread:$0]  %s2018, 32, %s9, [#allocation5]
        $region92: #{tpu_custom_call.1} parent=55 // pred_fallthru
          _
        // Predicated region
        $region93: #{tpu_custom_call.1} parent=55 // pred_check
          %p2021 = pneg %p238
        $region94: #{tpu_custom_call.1} parent=55 // pred_check_branch
          %2023 = sbr.rel (%p2021) target = $region96
        $region95: #{tpu_custom_call.1} parent=55 // pred_region
          %2024 = dma.done [#allocation5], 32
        $region96: #{tpu_custom_call.1} parent=55 // pred_fallthru
          _
      $region56: #{tpu_custom_call.1} parent=5 // pred_fallthru
        _
      %p2025 = scmp.le.s32.totalorder 2, %s22
      // Predicated region
      $region97: #{tpu_custom_call.1} parent=5 // pred_check
        %p2026 = pneg %p2025
      $region98: #{tpu_custom_call.1} parent=5 // pred_check_branch
        %2028 = sbr.rel (%p2026) target = $region100
      $region99: #{tpu_custom_call.1} parent=5 // pred_region
        %s2029 = ssub.s32 %s22, 2
      $region100: #{tpu_custom_call.1} parent=5 // pred_fallthru
        _
    $region6: #{tpu_custom_call.1} parent=1 // loop_footer
      %s26 = sadd.s32 1, %s22
    $region7: #{tpu_custom_call.1} parent=1 // loop_footer_branch
      %21 = sbr.rel target = $region3
    $region8: #{tpu_custom_call.1} parent=1 // loop_exit
      _
    %2030 = vsyncpa [#allocation4], 1
    %s2031 = scalar_lea.sflag [#allocation4], 1
    %2032 = vsyncpa %s2031, 1
    %2033 = vsyncpa [#allocation9], 1
    %2034 = vsyncpa [#allocation12], 1
    %2035 = vsyncpa [#allocation5], 1
    %s2036 = scalar_lea.sflag [#allocation5], 1
    %2037 = vsyncpa %s2036, 1
    %2038 = vsyncpa [#allocation6], 1
    %s2039 = scalar_lea.sflag [#allocation6], 1
    %2040 = vsyncpa %s2039, 1

</llo_original>
